<compile_context>
chip_gen: v7x
topology: tpu7x:2x2x1
jax: 0.10.0
libtpu: 0.0.40
codegen_flags: <defaults>
</compile_context>

<pallas_src>
import functools

import jax
import jax.numpy as jnp
from jax.experimental import pallas as pl
from jax.experimental.pallas import tpu as pltpu


def _round_up(n, m):
    return ((n + m - 1) // m) * m


# ---------------------------------------------------------------------------
# Kernel
# ---------------------------------------------------------------------------
def _spectral_matmul_kernel(x_ref, w_ref, o_ref):
    """Per-mode complex channel contraction from a non-redundant weight tile.

    x_ref: (KT, 2, B, Cin_p)      bf16, axis 1 = [real, imag]
    w_ref: (KT, Cin_p, 2*Cout_p)  bf16, last axis = [wr | wi]
    o_ref: (KT, B, 2*Cout_p)      f32,  last axis = [or | oi]
    """
    cout_p = o_ref.shape[-1] // 2
    x = x_ref[...]
    xr = x[:, 0]          # (KT, B, Cin_p)
    xi = x[:, 1]
    w = w_ref[...]        # (KT, Cin_p, 2*Cout_p)

    # Batched-over-KT MXU matmuls with f32 accumulation.
    # TODO(synk): verify via pl.lower_as_mlir / bundle dump that the batched
    # dot_general lowers to per-mode vmatmul pushes (fall back to an unrolled
    # fori_loop of 2-D dots if not) -- the kernel is ~25x memory-bound anyway.
    t_r = jnp.einsum('kbi,kio->kbo', xr, w, preferred_element_type=jnp.float32)
    t_i = jnp.einsum('kbi,kio->kbo', xi, w, preferred_element_type=jnp.float32)

    # t_r = [xr@wr | xr@wi],  t_i = [xi@wr | xi@wi]
    o_re = t_r[..., :cout_p] - t_i[..., cout_p:]   # xr@wr - xi@wi
    o_im = t_r[..., cout_p:] + t_i[..., :cout_p]   # xr@wi + xi@wr
    o_ref[...] = jnp.concatenate([o_re, o_im], axis=-1).astype(o_ref.dtype)


# ---------------------------------------------------------------------------
# Tiling / VMEM heuristics
# ---------------------------------------------------------------------------
def _default_vmem_limit():
    """~Half the physical VMEM (64 MiB on v5e/v6e, 32 MiB on v7x)."""
    try:
        cap = int(pltpu.get_tpu_info().vmem_capacity_bytes)
    except Exception:
        cap = 64 * 1024 * 1024  # conservative fallback (v7x physical size)
    return int(min(max(cap // 2, 32 * 1024 * 1024), 96 * 1024 * 1024))


def _pick_block_k(K, per_mode_bytes, budget, max_block=512):
    """Largest divisor of K within the per-tile byte budget, preferring an
    even grid count (>=2) so v7x's two TensorCores split the work evenly."""
    cap = int(max(1, min(max_block, budget // max(per_mode_bytes, 1))))
    divisors = [d for d in range(1, min(K, cap) + 1) if K % d == 0]
    even = [d for d in divisors if (K // d) % 2 == 0]
    if even:
        return max(even)
    if divisors:
        return max(divisors)
    return min(cap, K)


# ---------------------------------------------------------------------------
# Pallas wrapper
# ---------------------------------------------------------------------------
def spectral_mode_matmul(x_packed, w_packed, *, block_k=None, vmem_limit_bytes=None):
    """x_packed: (K, 2, B, Cin_p); w_packed: (K, Cin_p, 2*Cout_p)
    -> (K, B, 2*Cout_p) float32."""
    K, two, B, Cin_p = x_packed.shape
    assert two == 2
    Kw, Cin_pw, Cout2 = w_packed.shape
    assert Kw == K and Cin_pw == Cin_p and Cout2 % 2 == 0

    out_dtype = jnp.float32
    per_mode_bytes = (2 * B * Cin_p * x_packed.dtype.itemsize
                      + Cin_p * Cout2 * w_packed.dtype.itemsize
                      + B * Cout2 * jnp.dtype(out_dtype).itemsize)

    if vmem_limit_bytes is None:
        vmem_limit_bytes = _default_vmem_limit()
    if block_k is None:
        # Keep the double-buffered (x + w + out) set under ~60% of the limit.
        block_k = _pick_block_k(K, per_mode_bytes, budget=(vmem_limit_bytes * 3) // 10)
    block_k = int(max(1, min(block_k, K)))

    # Auto-picked block_k divides K; padding only triggers for a caller-supplied
    # block_k that does not (padded modes are zero and sliced off below).
    k_pad = pl.cdiv(K, block_k) * block_k
    if k_pad != K:
        x_packed = jnp.pad(x_packed, ((0, k_pad - K), (0, 0), (0, 0), (0, 0)))
        w_packed = jnp.pad(w_packed, ((0, k_pad - K), (0, 0), (0, 0)))
    grid = (k_pad // block_k,)

    # Two (B, Cin_p) @ (Cin_p, 2*Cout_p) matmuls per retained mode.
    flops = 4 * k_pad * B * Cin_p * Cout2
    bytes_accessed = (k_pad * 2 * B * Cin_p * x_packed.dtype.itemsize
                      + k_pad * Cin_p * Cout2 * w_packed.dtype.itemsize
                      + k_pad * B * Cout2 * jnp.dtype(out_dtype).itemsize)

    out = pl.pallas_call(
        _spectral_matmul_kernel,
        out_shape=jax.ShapeDtypeStruct((k_pad, B, Cout2), out_dtype),
        grid_spec=pltpu.PrefetchScalarGridSpec(
            num_scalar_prefetch=0,
            grid=grid,
            # Only the leading K (modes) axis is tiled; trailing dims are full
            # extents so no (8,128) blocking constraint applies.  Each weight
            # tile is DMA'd exactly once (index_map depends only on k).
            in_specs=[
                pl.BlockSpec((block_k, 2, B, Cin_p), lambda k: (k, 0, 0, 0)),
                pl.BlockSpec((block_k, Cin_p, Cout2), lambda k: (k, 0, 0)),
            ],
            out_specs=pl.BlockSpec((block_k, B, Cout2), lambda k: (k, 0, 0)),
        ),
        compiler_params=pltpu.CompilerParams(
            # K tiles are independent -> shard across both TensorCores on v7x.
            dimension_semantics=("parallel",),
            vmem_limit_bytes=int(vmem_limit_bytes),
        ),
        cost_estimate=pl.CostEstimate(
            flops=int(flops), transcendentals=0, bytes_accessed=int(bytes_accessed)),
    )(x_packed, w_packed)

    return out[:K] if k_pad != K else out


# ---------------------------------------------------------------------------
# Host-side packing (weights packed ONCE; activations packed per forward)
# ---------------------------------------------------------------------------
def pack_spectral_weights(weights1, weights2, *, channel_pad=64, dtype=jnp.bfloat16):
    """(Cin, Cout, m1, m2) complex x2 -> (K, Cin_p, 2*Cout_p) = [wr | wi].

    Non-redundant (wr, wi stored once), channel-padded to multiples of
    `channel_pad`, cast to the streamed compute dtype.  Call once at parameter
    init / load time and keep the result as the parameter.
    """
    Cin, Cout, m1, m2 = weights1.shape
    Cin_p = _round_up(Cin, channel_pad)
    Cout_p = _round_up(Cout, channel_pad)

    def pack(w):
        w = jnp.transpose(w.reshape(Cin, Cout, m1 * m2), (2, 0, 1))   # (Kh, Cin, Cout)
        wr = jnp.real(w).astype(jnp.float32)
        wi = jnp.imag(w).astype(jnp.float32)
        pad = ((0, 0), (0, Cin_p - Cin), (0, Cout_p - Cout))
        wr = jnp.pad(wr, pad)
        wi = jnp.pad(wi, pad)
        return jnp.concatenate([wr, wi], axis=-1).astype(dtype)       # (Kh, Cin_p, 2*Cout_p)

    return jnp.concatenate([pack(weights1), pack(weights2)], axis=0)


def _pack_inputs(x_ft, modes1, modes2, cin_p, dtype):
    """Gather the two retained corner blocks of x_ft into (K, 2, B, Cin_p).

    Real/imag live on their own axis (no lane slicing needed in-kernel).
    Single stack + transpose + pad + cast pass (fused by XLA under jit).
    """
    B, Cin, H, _ = x_ft.shape
    Kh = modes1 * modes2
    r1 = x_ft[:, :, :modes1, :modes2].reshape(B, Cin, Kh)
    r2 = x_ft[:, :, H - modes1:, :modes2].reshape(B, Cin, Kh)
    xk = jnp.concatenate([r1, r2], axis=-1)                        # (B, Cin, K)
    xri = jnp.stack([jnp.real(xk), jnp.imag(xk)], axis=0)          # (2, B, Cin, K)
    xri = jnp.transpose(xri, (3, 0, 1, 2))                         # (K, 2, B, Cin)
    if cin_p != Cin:
        xri = jnp.pad(xri, ((0, 0), (0, 0), (0, 0), (0, cin_p - Cin)))
    # TODO(synk): a fully in-kernel gather of the corner blocks (Element /
    # scalar-prefetch index maps on a real/imag-split spectrum) would remove
    # this remaining HBM marshaling pass.
    return xri.astype(dtype)


# ---------------------------------------------------------------------------
# Forward passes
# ---------------------------------------------------------------------------
def spectral_conv2d_packed(x, w_packed, *, out_channels, modes1, modes2, block_k=None):
    """Forward with pre-packed weights (the fast path; pack weights once).

    x:        (B, Cin, H, W) float32
    w_packed: (2*modes1*modes2, Cin_p, 2*Cout_p) bf16 from pack_spectral_weights
    returns:  (B, out_channels, H, W) float32
    """
    B, Cin, H, W = x.shape
    Wf = W // 2 + 1
    Kh = modes1 * modes2
    K, Cin_p, Cout2 = w_packed.shape
    Cout_p = Cout2 // 2
    Cout = out_channels
    assert K == 2 * Kh and Cin_p >= Cin and Cout_p >= Cout

    # TODO(synk): FFTs have no Pallas TPU primitive; rfft2/irfft2 stay in jnp.
    x_ft = jnp.fft.rfft2(x, norm='ortho')                          # (B, Cin, H, Wf) c64

    x_packed = _pack_inputs(x_ft, modes1, modes2, Cin_p, w_packed.dtype)
    out_packed = spectral_mode_matmul(x_packed, w_packed, block_k=block_k)  # (K, B, 2*Cout_p)

    o_r = out_packed[..., :Cout]                                   # drop channel padding
    o_i = out_packed[..., Cout_p:Cout_p + Cout]
    out_c = jnp.transpose((o_r + 1j * o_i).astype(jnp.complex64), (1, 2, 0))  # (B, Cout, K)

    out1 = out_c[:, :, :Kh].reshape(B, Cout, modes1, modes2)
    out2 = out_c[:, :, Kh:].reshape(B, Cout, modes1, modes2)
    out_ft = jnp.zeros((B, Cout, H, Wf), dtype=jnp.complex64)
    out_ft = out_ft.at[:, :, :modes1, :modes2].set(out1)
    out_ft = out_ft.at[:, :, H - modes1:, :modes2].set(out2)

    y = jnp.fft.irfft2(out_ft, s=(H, W), norm='ortho')             # (B, Cout, H, W)
    return y.astype(jnp.float32)


def spectral_conv2d(x, weights1, weights2, modes1, modes2, *, block_k=None, channel_pad=64):
    """Convenience wrapper taking the raw complex weights (packs per call;
    prefer packing once with pack_spectral_weights and using the packed path)."""
    w_packed = pack_spectral_weights(weights1, weights2, channel_pad=channel_pad)
    return spectral_conv2d_packed(x, w_packed, out_channels=weights1.shape[1],
                                  modes1=modes1, modes2=modes2, block_k=block_k)


def _reference(x, weights1, weights2, modes1, modes2):
    """Pure-JAX reference mirroring the PyTorch forward exactly."""
    B, Cin, H, W = x.shape
    Cout = weights1.shape[1]
    Wf = W // 2 + 1
    x_ft = jnp.fft.rfft2(x, norm='ortho')
    out_ft = jnp.zeros((B, Cout, H, Wf), dtype=jnp.complex64)
    out_ft = out_ft.at[:, :, :modes1, :modes2].set(
        jnp.einsum('bixy,ioxy->boxy', x_ft[:, :, :modes1, :modes2], weights1))
    out_ft = out_ft.at[:, :, H - modes1:, :modes2].set(
        jnp.einsum('bixy,ioxy->boxy', x_ft[:, :, H - modes1:, :modes2], weights2))
    return jnp.fft.irfft2(out_ft, s=(H, W), norm='ortho').astype(jnp.float32)


if __name__ == "__main__":
    # Small shapes consistent with the module.
    B, Cin, Cout = 2, 4, 4
    H = W = 16
    modes1 = modes2 = 4

    key = jax.random.PRNGKey(0)
    kx, kw1r, kw1i, kw2r, kw2i = jax.random.split(key, 5)

    x = jax.random.normal(kx, (B, Cin, H, W), dtype=jnp.float32)

    scale = 1.0 / (Cin * Cout)
    weights1 = scale * (jax.random.normal(kw1r, (Cin, Cout, modes1, modes2))
                        + 1j * jax.random.normal(kw1i, (Cin, Cout, modes1, modes2))
                        ).astype(jnp.complex64)
    weights2 = scale * (jax.random.normal(kw2r, (Cin, Cout, modes1, modes2))
                        + 1j * jax.random.normal(kw2i, (Cin, Cout, modes1, modes2))
                        ).astype(jnp.complex64)

    # Weight packing hoisted out of the forward path: pack once, store packed.
    w_packed = jax.block_until_ready(pack_spectral_weights(weights1, weights2))

    # block_k=8 -> grid=(4,): exercises the pipelined, parallel K grid even at
    # these toy sizes (auto selection would pick one/two big tiles here).
    fwd = jax.jit(functools.partial(
        spectral_conv2d_packed, out_channels=Cout, modes1=modes1, modes2=modes2,
        block_k=8))

    y = jax.block_until_ready(fwd(x, w_packed))

    y_ref = _reference(x, weights1, weights2, modes1, modes2)
    assert y.shape == (B, Cout, H, W)
    # Tolerance covers bf16-streamed operands (f32 accumulation) vs. the
    # complex64 XLA einsum reference.
    assert jnp.allclose(y, y_ref, atol=1e-2, rtol=1e-2), "mismatch vs reference"

    print("KERNEL_OK")
</pallas_src>

<mosaic_0001>
module attributes {stable_mosaic.version = 11 : i64} {
  func.func @_spectral_matmul_kernel(%arg0: i32, %arg1: memref<8x2x2x64xbf16, #tpu.memory_space<vmem>>, %arg2: memref<8x64x128xbf16, #tpu.memory_space<vmem>>, %arg3: memref<8x2x128xf32, #tpu.memory_space<vmem>>) attributes {dimension_semantics = [#tpu.dimension_semantics<parallel>], iteration_bounds = array<i64: 4>, scalar_prefetch = 0 : i64, scratch_operands = 0 : i64, tpu.core_type = #tpu.core_type<tc>, window_params = [{transform_indices = @transform_0, window_bounds = array<i64: 8, 2, 2, 64>}, {transform_indices = @transform_1, window_bounds = array<i64: 8, 64, 128>}, {transform_indices = @transform_2, window_bounds = array<i64: 8, 2, 128>}]} {
    %c0 = arith.constant 0 : index
    %c0_0 = arith.constant 0 : index
    %c0_1 = arith.constant 0 : index
    %c0_2 = arith.constant 0 : index
    %0 = vector.load %arg1[%c0, %c0_0, %c0_1, %c0_2] : memref<8x2x2x64xbf16, #tpu.memory_space<vmem>>, vector<8x2x2x64xbf16>
    %1 = vector.extract_strided_slice %0 {offsets = [0, 0, 0, 0], sizes = [8, 1, 2, 64], strides = [1, 1, 1, 1]} : vector<8x2x2x64xbf16> to vector<8x1x2x64xbf16>
    %2 = vector.shape_cast %1 : vector<8x1x2x64xbf16> to vector<8x2x64xbf16>
    %3 = vector.extract_strided_slice %0 {offsets = [0, 1, 0, 0], sizes = [8, 1, 2, 64], strides = [1, 1, 1, 1]} : vector<8x2x2x64xbf16> to vector<8x1x2x64xbf16>
    %4 = vector.shape_cast %3 : vector<8x1x2x64xbf16> to vector<8x2x64xbf16>
    %c0_3 = arith.constant 0 : index
    %c0_4 = arith.constant 0 : index
    %c0_5 = arith.constant 0 : index
    %5 = vector.load %arg2[%c0_3, %c0_4, %c0_5] : memref<8x64x128xbf16, #tpu.memory_space<vmem>>, vector<8x64x128xbf16>
    "tpu.trace_start"() <{level = 10 : i32, message = "kbi,kio->kbo"}> : () -> ()
    %cst = arith.constant dense<0.000000e+00> : vector<8x2x128xf32>
    %6 = tpu.matmul %2, %5, %cst {dimension_numbers = #tpu.dot_dimension_numbers<[2], [1], [1], [2], [0, 0, 0, 1, 1, 2], [0], [0]>} : vector<8x2x64xbf16>, vector<8x64x128xbf16>, vector<8x2x128xf32> -> vector<8x2x128xf32>
    %cst_6 = arith.constant dense<0.000000e+00> : vector<8x2x128xf32>
    %7 = tpu.matmul %4, %5, %cst_6 {dimension_numbers = #tpu.dot_dimension_numbers<[2], [1], [1], [2], [0, 0, 0, 1, 1, 2], [0], [0]>} : vector<8x2x64xbf16>, vector<8x64x128xbf16>, vector<8x2x128xf32> -> vector<8x2x128xf32>
    "tpu.trace_stop"() : () -> ()
    %8 = vector.extract_strided_slice %6 {offsets = [0, 0, 0], sizes = [8, 2, 64], strides = [1, 1, 1]} : vector<8x2x128xf32> to vector<8x2x64xf32>
    %9 = vector.extract_strided_slice %7 {offsets = [0, 0, 64], sizes = [8, 2, 64], strides = [1, 1, 1]} : vector<8x2x128xf32> to vector<8x2x64xf32>
    %10 = arith.subf %8, %9 : vector<8x2x64xf32>
    %11 = vector.extract_strided_slice %6 {offsets = [0, 0, 64], sizes = [8, 2, 64], strides = [1, 1, 1]} : vector<8x2x128xf32> to vector<8x2x64xf32>
    %12 = vector.extract_strided_slice %7 {offsets = [0, 0, 0], sizes = [8, 2, 64], strides = [1, 1, 1]} : vector<8x2x128xf32> to vector<8x2x64xf32>
    %13 = arith.addf %11, %12 : vector<8x2x64xf32>
    %14 = tpu.concatenate %10, %13 in 2 : vector<8x2x64xf32>, vector<8x2x64xf32> -> vector<8x2x128xf32>
    %c0_7 = arith.constant 0 : index
    %c0_8 = arith.constant 0 : index
    %c0_9 = arith.constant 0 : index
    %15 = vector.load %arg3[%c0_7, %c0_8, %c0_9] : memref<8x2x128xf32, #tpu.memory_space<vmem>>, vector<8x2x128xf32>
    tpu.vector_store %arg3[%c0_7, %c0_8, %c0_9], %14 {strides = array<i32>} : memref<8x2x128xf32, #tpu.memory_space<vmem>>, vector<8x2x128xf32>,
    return
  }
  func.func @transform_0(%arg0: i32) -> (i32, i32, i32, i32) {
    %c0_i32 = arith.constant 0 : i32
    %c0_i32_0 = arith.constant 0 : i32
    %c0_i32_1 = arith.constant 0 : i32
    %c0_i32_2 = arith.constant 0 : i32
    return %arg0, %c0_i32, %c0_i32_0, %c0_i32_1 : i32, i32, i32, i32
  }
  func.func @transform_1(%arg0: i32) -> (i32, i32, i32) {
    %c0_i32 = arith.constant 0 : i32
    %c0_i32_0 = arith.constant 0 : i32
    %c0_i32_1 = arith.constant 0 : i32
    return %arg0, %c0_i32, %c0_i32_0 : i32, i32, i32
  }
  func.func @transform_2(%arg0: i32) -> (i32, i32, i32) {
    %c0_i32 = arith.constant 0 : i32
    %c0_i32_0 = arith.constant 0 : i32
    %c0_i32_1 = arith.constant 0 : i32
    return %arg0, %c0_i32, %c0_i32_0 : i32, i32, i32
  }
}

</mosaic_0001>

<llo_original>
// kernel: reverse.1
$region0: #{reverse.1}
  %s0 = inlined_call_operand.vmem [shape: f32[2,4,16,7], index: 0, kind: input, shape index: {}]
  %s1 = inlined_call_operand.vmem [shape: f32[2,4,16,7], index: 1, kind: output, shape index: {}]
  $region1: #{reverse.1} parent=0
    #allocation0 [shape = 'u8[65536]{0}', space=vmem, size = 0x10000, scoped, tag = 'operand span for operand 0']
    #allocation1 [shape = 'u8[32768]{0}', space=vmem, size = 0x8000, scoped, tag = 'operand span for operand 1']
    %s2 = scalar_lea.vmem [#allocation0], 8
    // Predicated region
    $region2: #{reverse.1} parent=1 // pred_check
      _
    $region3: #{reverse.1} parent=1 // pred_check_branch
      %4 = sbr.rel (0) target = $region5
    $region4: #{reverse.1} parent=1 // pred_region
      // Predicated region
      $region6: #{reverse.1} parent=4 // pred_check
        _
      $region7: #{reverse.1} parent=4 // pred_check_branch
        %6 = sbr.rel (0) target = $region9
      $region8: #{reverse.1} parent=4 // pred_region
        // Predicated region
        $region21: #{reverse.1} parent=8 // pred_check
          _
        $region22: #{reverse.1} parent=8 // pred_check_branch
          %35 = sbr.rel (0) target = $region24
        $region23: #{reverse.1} parent=8 // pred_region
          loop: start=0, step=1, limit=1
          $region25: #{reverse.1} parent=23 // loop_pre_header
            _
          $region26: #{reverse.1} parent=23 // loop_header
            %s37 = sphi 0, %s41
            %p38 = scmp.ge.s32.totalorder %s37, 1
            %s42 = sphi %s0, %s0
            %s43 = sphi %s2, %s2
          $region27: #{reverse.1} parent=23 // loop_header_branch
            %40 = sbr.rel (%p38) target = $region31
          $region28: #{reverse.1} parent=23 // loop_body
            %v44 = vld [vmem:[%s42] sm:$0xff]
            %45 = vst [vmem:[%s43] sm:$0xff] %v44
            %v46 = vld [vmem:[%s42 + $0x8] sm:$0xff]
            %47 = vst [vmem:[%s43 + $0x10] sm:$0xff] %v46
            %v48 = vld [vmem:[%s42 + $0x10] sm:$0xff]
            %49 = vst [vmem:[%s43 + $0x20] sm:$0xff] %v48
            %v50 = vld [vmem:[%s42 + $0x18] sm:$0xff]
            %51 = vst [vmem:[%s43 + $0x30] sm:$0xff] %v50
            %v52 = vld [vmem:[%s42 + $0x20] sm:$0xff]
            %53 = vst [vmem:[%s43 + $0x40] sm:$0xff] %v52
            %v54 = vld [vmem:[%s42 + $0x28] sm:$0xff]
            %55 = vst [vmem:[%s43 + $0x50] sm:$0xff] %v54
            %v56 = vld [vmem:[%s42 + $0x30] sm:$0xff]
            %57 = vst [vmem:[%s43 + $0x60] sm:$0xff] %v56
            %v58 = vld [vmem:[%s42 + $0x38] sm:$0xff]
            %59 = vst [vmem:[%s43 + $0x70] sm:$0xff] %v58
          $region29: #{reverse.1} parent=23 // loop_footer
            %s41 = sadd.s32 1, %s37
          $region30: #{reverse.1} parent=23 // loop_footer_branch
            %36 = sbr.rel target = $region26
          $region31: #{reverse.1} parent=23 // loop_exit
            _
        $region24: #{reverse.1} parent=8 // pred_fallthru
          _
        // Predicated region
        $region32: #{reverse.1} parent=8 // pred_check
          _
        $region33: #{reverse.1} parent=8 // pred_check_branch
          %61 = sbr.rel target = $region35
        $region34: #{reverse.1} parent=8 // pred_region
          _
        $region35: #{reverse.1} parent=8 // pred_fallthru
          _
      $region9: #{reverse.1} parent=4 // pred_fallthru
        _
      // Predicated region
      $region10: #{reverse.1} parent=4 // pred_check
        _
      $region11: #{reverse.1} parent=4 // pred_check_branch
        %8 = sbr.rel target = $region13
      $region12: #{reverse.1} parent=4 // pred_region
        loop: start=0, step=1, limit=1
        $region14: #{reverse.1} parent=12 // loop_pre_header
          _
        $region15: #{reverse.1} parent=12 // loop_header
          %s11 = sphi 0, %s15
          %p12 = scmp.ge.s32.totalorder %s11, 1
          %s16 = sphi %s0, %s0
          %s17 = sphi %s2, %s2
        $region16: #{reverse.1} parent=12 // loop_header_branch
          %14 = sbr.rel (%p12) target = $region20
        $region17: #{reverse.1} parent=12 // loop_body
          %v18 = vld [vmem:[%s16] sm:$0xff]
          %19 = vst [vmem:[%s17] sm:$0xff] %v18
          %v20 = vld [vmem:[%s16 + $0x8] sm:$0xff]
          %21 = vst [vmem:[%s17 + $0x10] sm:$0xff] %v20
          %v22 = vld [vmem:[%s16 + $0x10] sm:$0xff]
          %23 = vst [vmem:[%s17 + $0x20] sm:$0xff] %v22
          %v24 = vld [vmem:[%s16 + $0x18] sm:$0xff]
          %25 = vst [vmem:[%s17 + $0x30] sm:$0xff] %v24
          %v26 = vld [vmem:[%s16 + $0x20] sm:$0xff]
          %27 = vst [vmem:[%s17 + $0x40] sm:$0xff] %v26
          %v28 = vld [vmem:[%s16 + $0x28] sm:$0xff]
          %29 = vst [vmem:[%s17 + $0x50] sm:$0xff] %v28
          %v30 = vld [vmem:[%s16 + $0x30] sm:$0xff]
          %31 = vst [vmem:[%s17 + $0x60] sm:$0xff] %v30
          %v32 = vld [vmem:[%s16 + $0x38] sm:$0xff]
          %33 = vst [vmem:[%s17 + $0x70] sm:$0xff] %v32
        $region18: #{reverse.1} parent=12 // loop_footer
          %s15 = sadd.s32 1, %s11
        $region19: #{reverse.1} parent=12 // loop_footer_branch
          %10 = sbr.rel target = $region15
        $region20: #{reverse.1} parent=12 // loop_exit
          _
      $region13: #{reverse.1} parent=4 // pred_fallthru
        _
    $region5: #{reverse.1} parent=1 // pred_fallthru
      _
    %62 = vnop
    %s63 = scalar_lea.vmem [#allocation0], 7
    %v64 = vld [vmem:[%s63] ss:$-1 sm:$0xff]
    %v65 = vrot.slane %v64, 1
    %66 = vst [vmem:[#allocation1] sm:$0xff] %v65
    %s67 = scalar_lea.vmem [#allocation0], 8
    %s68 = scalar_lea.vmem %s67, 7 [#allocation0]
    %v69 = vld [vmem:[%s68] ss:$-1 sm:$0xff]
    %v70 = vrot.slane %v69, 1
    %v71 = vlaneseq
    %v72 = vshrl.u32 %v71, 7
    %vm73 = vcmp.lt.s32.totalorder %v72, 7
    %74 = vst.msk [vmem:[#allocation1] sm:$0xff] %vm73, %v70
    %s75 = scalar_lea.vmem [#allocation1], 8
    %s76 = scalar_lea.vmem [#allocation0], 16
    %s77 = scalar_lea.vmem %s76, 7 [#allocation0]
    %v78 = vld [vmem:[%s77] ss:$-1 sm:$0xff]
    %v79 = vrot.slane %v78, 1
    %80 = vst [vmem:[%s75] sm:$0xff] %v79
    %s81 = scalar_lea.vmem %s76, 8 [#allocation0]
    %s82 = scalar_lea.vmem %s81, 7 [#allocation0]
    %v83 = vld [vmem:[%s82] ss:$-1 sm:$0xff]
    %v84 = vrot.slane %v83, 1
    %v85 = vlaneseq
    %v86 = vshrl.u32 %v85, 7
    %vm87 = vcmp.lt.s32.totalorder %v86, 7
    %88 = vst.msk [vmem:[%s75] sm:$0xff] %vm87, %v84
    %s89 = scalar_lea.vmem [#allocation1], 16
    %s90 = scalar_lea.vmem [#allocation0], 32
    %s91 = scalar_lea.vmem %s90, 7 [#allocation0]
    %v92 = vld [vmem:[%s91] ss:$-1 sm:$0xff]
    %v93 = vrot.slane %v92, 1
    %94 = vst [vmem:[%s89] sm:$0xff] %v93
    %s95 = scalar_lea.vmem %s90, 8 [#allocation0]
    %s96 = scalar_lea.vmem %s95, 7 [#allocation0]
    %v97 = vld [vmem:[%s96] ss:$-1 sm:$0xff]
    %v98 = vrot.slane %v97, 1
    %v99 = vlaneseq
    %v100 = vshrl.u32 %v99, 7
    %vm101 = vcmp.lt.s32.totalorder %v100, 7
    %102 = vst.msk [vmem:[%s89] sm:$0xff] %vm101, %v98
    %s103 = scalar_lea.vmem [#allocation1], 24
    %s104 = scalar_lea.vmem [#allocation0], 48
    %s105 = scalar_lea.vmem %s104, 7 [#allocation0]
    %v106 = vld [vmem:[%s105] ss:$-1 sm:$0xff]
    %v107 = vrot.slane %v106, 1
    %108 = vst [vmem:[%s103] sm:$0xff] %v107
    %s109 = scalar_lea.vmem %s104, 8 [#allocation0]
    %s110 = scalar_lea.vmem %s109, 7 [#allocation0]
    %v111 = vld [vmem:[%s110] ss:$-1 sm:$0xff]
    %v112 = vrot.slane %v111, 1
    %v113 = vlaneseq
    %v114 = vshrl.u32 %v113, 7
    %vm115 = vcmp.lt.s32.totalorder %v114, 7
    %116 = vst.msk [vmem:[%s103] sm:$0xff] %vm115, %v112
    %s117 = scalar_lea.vmem [#allocation1], 32
    %s118 = scalar_lea.vmem [#allocation0], 64
    %s119 = scalar_lea.vmem %s118, 7 [#allocation0]
    %v120 = vld [vmem:[%s119] ss:$-1 sm:$0xff]
    %v121 = vrot.slane %v120, 1
    %122 = vst [vmem:[%s117] sm:$0xff] %v121
    %s123 = scalar_lea.vmem %s118, 8 [#allocation0]
    %s124 = scalar_lea.vmem %s123, 7 [#allocation0]
    %v125 = vld [vmem:[%s124] ss:$-1 sm:$0xff]
    %v126 = vrot.slane %v125, 1
    %v127 = vlaneseq
    %v128 = vshrl.u32 %v127, 7
    %vm129 = vcmp.lt.s32.totalorder %v128, 7
    %130 = vst.msk [vmem:[%s117] sm:$0xff] %vm129, %v126
    %s131 = scalar_lea.vmem [#allocation1], 40
    %s132 = scalar_lea.vmem [#allocation0], 80
    %s133 = scalar_lea.vmem %s132, 7 [#allocation0]
    %v134 = vld [vmem:[%s133] ss:$-1 sm:$0xff]
    %v135 = vrot.slane %v134, 1
    %136 = vst [vmem:[%s131] sm:$0xff] %v135
    %s137 = scalar_lea.vmem %s132, 8 [#allocation0]
    %s138 = scalar_lea.vmem %s137, 7 [#allocation0]
    %v139 = vld [vmem:[%s138] ss:$-1 sm:$0xff]
    %v140 = vrot.slane %v139, 1
    %v141 = vlaneseq
    %v142 = vshrl.u32 %v141, 7
    %vm143 = vcmp.lt.s32.totalorder %v142, 7
    %144 = vst.msk [vmem:[%s131] sm:$0xff] %vm143, %v140
    %s145 = scalar_lea.vmem [#allocation1], 48
    %s146 = scalar_lea.vmem [#allocation0], 96
    %s147 = scalar_lea.vmem %s146, 7 [#allocation0]
    %v148 = vld [vmem:[%s147] ss:$-1 sm:$0xff]
    %v149 = vrot.slane %v148, 1
    %150 = vst [vmem:[%s145] sm:$0xff] %v149
    %s151 = scalar_lea.vmem %s146, 8 [#allocation0]
    %s152 = scalar_lea.vmem %s151, 7 [#allocation0]
    %v153 = vld [vmem:[%s152] ss:$-1 sm:$0xff]
    %v154 = vrot.slane %v153, 1
    %v155 = vlaneseq
    %v156 = vshrl.u32 %v155, 7
    %vm157 = vcmp.lt.s32.totalorder %v156, 7
    %158 = vst.msk [vmem:[%s145] sm:$0xff] %vm157, %v154
    %s159 = scalar_lea.vmem [#allocation1], 56
    %s160 = scalar_lea.vmem [#allocation0], 112
    %s161 = scalar_lea.vmem %s160, 7 [#allocation0]
    %v162 = vld [vmem:[%s161] ss:$-1 sm:$0xff]
    %v163 = vrot.slane %v162, 1
    %164 = vst [vmem:[%s159] sm:$0xff] %v163
    %s165 = scalar_lea.vmem %s160, 8 [#allocation0]
    %s166 = scalar_lea.vmem %s165, 7 [#allocation0]
    %v167 = vld [vmem:[%s166] ss:$-1 sm:$0xff]
    %v168 = vrot.slane %v167, 1
    %v169 = vlaneseq
    %v170 = vshrl.u32 %v169, 7
    %vm171 = vcmp.lt.s32.totalorder %v170, 7
    %172 = vst.msk [vmem:[%s159] sm:$0xff] %vm171, %v168
    // Predicated region
    $region36: #{reverse.1} parent=1 // pred_check
      _
    $region37: #{reverse.1} parent=1 // pred_check_branch
      %174 = sbr.rel (0) target = $region39
    $region38: #{reverse.1} parent=1 // pred_region
      // Predicated region
      $region40: #{reverse.1} parent=38 // pred_check
        _
      $region41: #{reverse.1} parent=38 // pred_check_branch
        %176 = sbr.rel (0) target = $region43
      $region42: #{reverse.1} parent=38 // pred_region
        // Predicated region
        $region55: #{reverse.1} parent=42 // pred_check
          _
        $region56: #{reverse.1} parent=42 // pred_check_branch
          %205 = sbr.rel (0) target = $region58
        $region57: #{reverse.1} parent=42 // pred_region
          loop: start=0, step=1, limit=1
          $region59: #{reverse.1} parent=57 // loop_pre_header
            _
          $region60: #{reverse.1} parent=57 // loop_header
            %s207 = sphi 0, %s211
            %p208 = scmp.ge.s32.totalorder %s207, 1
            %s212 = sphi [#allocation1], [#allocation1]
            %s213 = sphi %s1, %s1
          $region61: #{reverse.1} parent=57 // loop_header_branch
            %210 = sbr.rel (%p208) target = $region65
          $region62: #{reverse.1} parent=57 // loop_body
            %v214 = vld [vmem:[%s212] sm:$0xff]
            %215 = vst [vmem:[%s213] sm:$0xff] %v214
            %v216 = vld [vmem:[%s212 + $0x8] sm:$0xff]
            %217 = vst [vmem:[%s213 + $0x8] sm:$0xff] %v216
            %v218 = vld [vmem:[%s212 + $0x10] sm:$0xff]
            %219 = vst [vmem:[%s213 + $0x10] sm:$0xff] %v218
            %v220 = vld [vmem:[%s212 + $0x18] sm:$0xff]
            %221 = vst [vmem:[%s213 + $0x18] sm:$0xff] %v220
            %v222 = vld [vmem:[%s212 + $0x20] sm:$0xff]
            %223 = vst [vmem:[%s213 + $0x20] sm:$0xff] %v222
            %v224 = vld [vmem:[%s212 + $0x28] sm:$0xff]
            %225 = vst [vmem:[%s213 + $0x28] sm:$0xff] %v224
            %v226 = vld [vmem:[%s212 + $0x30] sm:$0xff]
            %227 = vst [vmem:[%s213 + $0x30] sm:$0xff] %v226
            %v228 = vld [vmem:[%s212 + $0x38] sm:$0xff]
            %229 = vst [vmem:[%s213 + $0x38] sm:$0xff] %v228
          $region63: #{reverse.1} parent=57 // loop_footer
            %s211 = sadd.s32 1, %s207
          $region64: #{reverse.1} parent=57 // loop_footer_branch
            %206 = sbr.rel target = $region60
          $region65: #{reverse.1} parent=57 // loop_exit
            _
        $region58: #{reverse.1} parent=42 // pred_fallthru
          _
        // Predicated region
        $region66: #{reverse.1} parent=42 // pred_check
          _
        $region67: #{reverse.1} parent=42 // pred_check_branch
          %231 = sbr.rel target = $region69
        $region68: #{reverse.1} parent=42 // pred_region
          _
        $region69: #{reverse.1} parent=42 // pred_fallthru
          _
      $region43: #{reverse.1} parent=38 // pred_fallthru
        _
      // Predicated region
      $region44: #{reverse.1} parent=38 // pred_check
        _
      $region45: #{reverse.1} parent=38 // pred_check_branch
        %178 = sbr.rel target = $region47
      $region46: #{reverse.1} parent=38 // pred_region
        loop: start=0, step=1, limit=1
        $region48: #{reverse.1} parent=46 // loop_pre_header
          _
        $region49: #{reverse.1} parent=46 // loop_header
          %s181 = sphi 0, %s185
          %p182 = scmp.ge.s32.totalorder %s181, 1
          %s186 = sphi [#allocation1], [#allocation1]
          %s187 = sphi %s1, %s1
        $region50: #{reverse.1} parent=46 // loop_header_branch
          %184 = sbr.rel (%p182) target = $region54
        $region51: #{reverse.1} parent=46 // loop_body
          %v188 = vld [vmem:[%s186] sm:$0xff]
          %189 = vst [vmem:[%s187] sm:$0xff] %v188
          %v190 = vld [vmem:[%s186 + $0x8] sm:$0xff]
          %191 = vst [vmem:[%s187 + $0x8] sm:$0xff] %v190
          %v192 = vld [vmem:[%s186 + $0x10] sm:$0xff]
          %193 = vst [vmem:[%s187 + $0x10] sm:$0xff] %v192
          %v194 = vld [vmem:[%s186 + $0x18] sm:$0xff]
          %195 = vst [vmem:[%s187 + $0x18] sm:$0xff] %v194
          %v196 = vld [vmem:[%s186 + $0x20] sm:$0xff]
          %197 = vst [vmem:[%s187 + $0x20] sm:$0xff] %v196
          %v198 = vld [vmem:[%s186 + $0x28] sm:$0xff]
          %199 = vst [vmem:[%s187 + $0x28] sm:$0xff] %v198
          %v200 = vld [vmem:[%s186 + $0x30] sm:$0xff]
          %201 = vst [vmem:[%s187 + $0x30] sm:$0xff] %v200
          %v202 = vld [vmem:[%s186 + $0x38] sm:$0xff]
          %203 = vst [vmem:[%s187 + $0x38] sm:$0xff] %v202
        $region52: #{reverse.1} parent=46 // loop_footer
          %s185 = sadd.s32 1, %s181
        $region53: #{reverse.1} parent=46 // loop_footer_branch
          %180 = sbr.rel target = $region49
        $region54: #{reverse.1} parent=46 // loop_exit
          _
      $region47: #{reverse.1} parent=38 // pred_fallthru
        _
    $region39: #{reverse.1} parent=1 // pred_fallthru
      _
    %232 = vnop

// kernel: spectral_conv2d_packed.1
$region0: #{spectral_conv2d_packed.1}
  #allocation0 [shape = 'u32[]', space=smem, size = 0x4, offset = 0x4, fixed_abs, tag = 'smem constant byte address 0x4 - core index']
  #allocation1 [shape = 'u32[144,128]{1,0:T(1,128)}', space=vmem, size = 0x12000, scoped, tag = 'internal scratch']
  %s0 = inlined_call_operand.vmem [shape: bf16[32,2,2,64], index: 0, kind: input, shape index: {}]
  %s1 = inlined_call_operand.vmem [shape: bf16[32,64,128], index: 1, kind: input, shape index: {}]
  %s2 = inlined_call_operand.vmem [shape: f32[32,2,128], index: 2, kind: output, shape index: {}]
  %s3 = sld [smem:[#allocation0]]
  $region41: #{spectral_conv2d_packed.1} parent=0
    _
  %s5 = ssub.s32 1, %s3
  %s6 = scalar_select 0, %s5, %s3
  loop: start=0, step=1, limit=6
  $region2: #{spectral_conv2d_packed.1} parent=0 // loop_pre_header
    _
  $region3: #{spectral_conv2d_packed.1} parent=0 // loop_header
    %s8 = sphi 0, %s12
    %p9 = scmp.ge.s32.totalorder %s8, 6
    %s18 = sphi 0, %s20
    %s21 = sphi 0, %s18
    %s22 = sphi 0, %s21
    %s38 = sphi 0, %s22
    %s44 = sphi 0, %s46
    %s47 = sphi 0, %s44
    %s48 = sphi 0, %s47
    %s64 = sphi 0, %s48
    %s70 = sphi 0, %s72
    %s73 = sphi 0, %s70
    %s74 = sphi 0, %s73
    %s90 = sphi 0, %s74
  $region4: #{spectral_conv2d_packed.1} parent=0 // loop_header_branch
    %11 = sbr.rel (%p9) target = $region8
  $region5: #{spectral_conv2d_packed.1} parent=0 // loop_body
    %s13 = ssub.s32 %s8, 1
    %s14 = ssub.s32 %s8, 2
    %s15 = sadd.s32 %s8, 1
    %s16 = ssub.s32 %s8, %s15
    %p17 = scmp.eq.s32.totalorder %s16, 0
    %s19 = sadd.s32 %s18, 1
    %s20 = scalar_select %p17, %s18, %s19
    %p23 = pneg %p17
    %p24 = scmp.eq.s32.totalorder %s8, 3
    %p25 = por %p23, %p24
    %p26 = scmp.ne.s32.totalorder %s18, %s21
    %p27 = scmp.eq.s32.totalorder %s8, 0
    %p28 = por %p26, %p27
    %p29 = scmp.ne.s32.totalorder %s18, %s21
    %p30 = scmp.eq.s32.totalorder %s13, 3
    %p31 = por %p29, %p30
    %p32 = scmp.ne.s32.totalorder %s21, %s22
    %p33 = scmp.eq.s32.totalorder %s13, 0
    %p34 = por %p32, %p33
    %p35 = scmp.ne.s32.totalorder %s21, %s22
    %p36 = scmp.eq.s32.totalorder %s14, 3
    %p37 = por %p35, %p36
    %p39 = scmp.ne.s32.totalorder %s22, %s38
    %p40 = scmp.eq.s32.totalorder %s14, 0
    %p41 = por %p39, %p40
    %s42 = ssub.s32 %s8, %s15
    %p43 = scmp.eq.s32.totalorder %s42, 0
    %s45 = sadd.s32 %s44, 1
    %s46 = scalar_select %p43, %s44, %s45
    %p49 = pneg %p43
    %p50 = scmp.eq.s32.totalorder %s8, 3
    %p51 = por %p49, %p50
    %p52 = scmp.ne.s32.totalorder %s44, %s47
    %p53 = scmp.eq.s32.totalorder %s8, 0
    %p54 = por %p52, %p53
    %p55 = scmp.ne.s32.totalorder %s44, %s47
    %p56 = scmp.eq.s32.totalorder %s13, 3
    %p57 = por %p55, %p56
    %p58 = scmp.ne.s32.totalorder %s47, %s48
    %p59 = scmp.eq.s32.totalorder %s13, 0
    %p60 = por %p58, %p59
    %p61 = scmp.ne.s32.totalorder %s47, %s48
    %p62 = scmp.eq.s32.totalorder %s14, 3
    %p63 = por %p61, %p62
    %p65 = scmp.ne.s32.totalorder %s48, %s64
    %p66 = scmp.eq.s32.totalorder %s14, 0
    %p67 = por %p65, %p66
    %s68 = ssub.s32 %s8, %s15
    %p69 = scmp.eq.s32.totalorder %s68, 0
    %s71 = sadd.s32 %s70, 1
    %s72 = scalar_select %p69, %s70, %s71
    %p75 = pneg %p69
    %p76 = scmp.eq.s32.totalorder %s8, 3
    %p77 = por %p75, %p76
    %p78 = scmp.ne.s32.totalorder %s70, %s73
    %p79 = scmp.eq.s32.totalorder %s8, 0
    %p80 = por %p78, %p79
    %p81 = scmp.ne.s32.totalorder %s70, %s73
    %p82 = scmp.eq.s32.totalorder %s13, 3
    %p83 = por %p81, %p82
    %p84 = scmp.ne.s32.totalorder %s73, %s74
    %p85 = scmp.eq.s32.totalorder %s13, 0
    %p86 = por %p84, %p85
    %p87 = scmp.ne.s32.totalorder %s73, %s74
    %p88 = scmp.eq.s32.totalorder %s14, 3
    %p89 = por %p87, %p88
    %p91 = scmp.ne.s32.totalorder %s74, %s90
    %p92 = scmp.eq.s32.totalorder %s14, 0
    %p93 = por %p91, %p92
    %p94 = scmp.le.s32.totalorder 1, %s8
    %p95 = scmp.lt.s32.totalorder %s8, 5
    %p96 = pnand %p94, %p95
    %p97 = pneg %p96
    // Predicated region
    $region9: #{spectral_conv2d_packed.1} parent=5 // pred_check
      _
    $region10: #{spectral_conv2d_packed.1} parent=5 // pred_check_branch
      %99 = sbr.rel (%p96) target = $region12
    $region11: #{spectral_conv2d_packed.1} parent=5 // pred_region
      %s100 = ssub.s32 %s8, 1
    $region12: #{spectral_conv2d_packed.1} parent=5 // pred_fallthru
      _
    %p101 = scmp.lt.s32.totalorder %s8, 4
    // Predicated region
    $region13: #{spectral_conv2d_packed.1} parent=5 // pred_check
      %p102 = pneg %p101
    $region14: #{spectral_conv2d_packed.1} parent=5 // pred_check_branch
      %104 = sbr.rel (%p102) target = $region16
    $region15: #{spectral_conv2d_packed.1} parent=5 // pred_region
      // Predicated region
      $region17: #{spectral_conv2d_packed.1} parent=15 // pred_check
        %p105 = pneg %p28
      $region18: #{spectral_conv2d_packed.1} parent=15 // pred_check_branch
        %107 = sbr.rel (%p105) target = $region20
      $region19: #{spectral_conv2d_packed.1} parent=15 // pred_region
        %s108 = smul.u32 8, %s8
        %p109 = scmp.lt.s32.totalorder %s108, 31
        %s110 = scalar_select %p109, %s108, 31
        %s111 = smul.addr %s110, 2
        %s112 = scalar_lea.vmem %s0, %s111
        %s113 = smul.u32 8, %s8
      $region20: #{spectral_conv2d_packed.1} parent=15 // pred_fallthru
        _
      // Predicated region
      $region21: #{spectral_conv2d_packed.1} parent=15 // pred_check
        %p114 = pneg %p54
      $region22: #{spectral_conv2d_packed.1} parent=15 // pred_check_branch
        %116 = sbr.rel (%p114) target = $region24
      $region23: #{spectral_conv2d_packed.1} parent=15 // pred_region
        %s117 = smul.u32 8, %s8
        %p118 = scmp.lt.s32.totalorder %s117, 31
        %s119 = scalar_select %p118, %s117, 31
        %s120 = smul.addr %s119, 8
        %s121 = smul.addr %s120, 4
        %s122 = scalar_lea.vmem %s1, %s121
        %s123 = smul.u32 8, %s8
      $region24: #{spectral_conv2d_packed.1} parent=15 // pred_fallthru
        _
    $region16: #{spectral_conv2d_packed.1} parent=5 // pred_fallthru
      _
    %p124 = scmp.le.s32.totalorder 1, %s8
    %p125 = scmp.lt.s32.totalorder %s8, 5
    %p126 = pnand %p124, %p125
    %p127 = pneg %p126
    // Predicated region
    $region25: #{spectral_conv2d_packed.1} parent=5 // pred_check
      _
    $region26: #{spectral_conv2d_packed.1} parent=5 // pred_check_branch
      %129 = sbr.rel (%p126) target = $region28
    $region27: #{spectral_conv2d_packed.1} parent=5 // pred_region
      %s130 = ssub.s32 %s8, 1
      %s131 = smul.u32 8, %s13
      %p132 = scmp.lt.s32.totalorder %s131, 31
      %s133 = scalar_select %p132, %s131, 31
      %s134 = smul.addr %s133, 2
      %s135 = scalar_lea.vmem %s0, %s134
      %p136 = pneg %p34
      %p137 = pneg %p31
      %s138 = smul.u32 8, %s13
      %p139 = scmp.lt.s32.totalorder %s138, 31
      %s140 = scalar_select %p139, %s138, 31
      %s141 = smul.addr %s140, 8
      %s142 = smul.addr %s141, 4
      %s143 = scalar_lea.vmem %s1, %s142
      %p144 = pneg %p60
      %p145 = pneg %p57
      %p146 = pneg %p86
      %p147 = pneg %p83
      %s148 = smul.u32 8, %s13
      %p149 = scmp.lt.s32.totalorder %s148, 31
      %s150 = scalar_select %p149, %s148, 31
      %s151 = smul.addr %s150, 2
      %s152 = scalar_lea.vmem %s2, %s151
      %s153 = smul.u32 8, %s13
      %p154 = scmp.lt.s32.totalorder %s153, 31
      %s155 = scalar_select %p154, %s153, 31
      %s156 = smul.addr %s155, 2
      %s157 = scalar_lea.vmem %s0, %s156
      %s158 = smul.u32 8, %s13
      %s159 = smul.u32 8, %s13
      %p160 = scmp.lt.s32.totalorder %s159, 31
      %s161 = scalar_select %p160, %s159, 31
      %s162 = smul.addr %s161, 8
      %s163 = smul.addr %s162, 4
      %s164 = scalar_lea.vmem %s1, %s163
      %s165 = smul.u32 8, %s13
      %s166 = smul.u32 8, %s13
      %p167 = scmp.lt.s32.totalorder %s166, 31
      %s168 = scalar_select %p167, %s166, 31
      %s169 = smul.addr %s168, 2
      %s170 = scalar_lea.vmem %s2, %s169
      %s171 = smul.u32 8, %s13
      %v173 = vld [vmem:[%s157] sm:$0x1]
      %v174 = vld [vmem:[%s157 + $0x1] sm:$0x1]
      %v175 = vld [vmem:[%s157 + $0x2] sm:$0x1]
      %v176 = vld [vmem:[%s157 + $0x3] sm:$0x1]
      %v177 = vld [vmem:[%s157 + $0x4] sm:$0x1]
      %v178 = vld [vmem:[%s157 + $0x5] sm:$0x1]
      %v179 = vld [vmem:[%s157 + $0x6] sm:$0x1]
      %v180 = vld [vmem:[%s157 + $0x7] sm:$0x1]
      %v181 = vld [vmem:[%s157 + $0x8] sm:$0x1]
      %v182 = vld [vmem:[%s157 + $0x9] sm:$0x1]
      %v183 = vld [vmem:[%s157 + $0xa] sm:$0x1]
      %v184 = vld [vmem:[%s157 + $0xb] sm:$0x1]
      %v185 = vld [vmem:[%s157 + $0xc] sm:$0x1]
      %v186 = vld [vmem:[%s157 + $0xd] sm:$0x1]
      %v187 = vld [vmem:[%s157 + $0xe] sm:$0x1]
      %v188 = vld [vmem:[%s157 + $0xf] sm:$0x1]
      %v189 = vld [vmem:[%s164] sm:$0xf]
      %v190 = vld [vmem:[%s164 + $0x4] sm:$0xf]
      %v191 = vld [vmem:[%s164 + $0x8] sm:$0xf]
      %v192 = vld [vmem:[%s164 + $0xc] sm:$0xf]
      %v193 = vld [vmem:[%s164 + $0x10] sm:$0xf]
      %v194 = vld [vmem:[%s164 + $0x14] sm:$0xf]
      %v195 = vld [vmem:[%s164 + $0x18] sm:$0xf]
      %v196 = vld [vmem:[%s164 + $0x1c] sm:$0xf]
      %v197 = vld [vmem:[%s164 + $0x20] sm:$0xf]
      %v198 = vld [vmem:[%s164 + $0x24] sm:$0xf]
      %v199 = vld [vmem:[%s164 + $0x28] sm:$0xf]
      %v200 = vld [vmem:[%s164 + $0x2c] sm:$0xf]
      %v201 = vld [vmem:[%s164 + $0x30] sm:$0xf]
      %v202 = vld [vmem:[%s164 + $0x34] sm:$0xf]
      %v203 = vld [vmem:[%s164 + $0x38] sm:$0xf]
      %v204 = vld [vmem:[%s164 + $0x3c] sm:$0xf]
      %v205 = vld [vmem:[%s164 + $0x40] sm:$0xf]
      %v206 = vld [vmem:[%s164 + $0x44] sm:$0xf]
      %v207 = vld [vmem:[%s164 + $0x48] sm:$0xf]
      %v208 = vld [vmem:[%s164 + $0x4c] sm:$0xf]
      %v209 = vld [vmem:[%s164 + $0x50] sm:$0xf]
      %v210 = vld [vmem:[%s164 + $0x54] sm:$0xf]
      %v211 = vld [vmem:[%s164 + $0x58] sm:$0xf]
      %v212 = vld [vmem:[%s164 + $0x5c] sm:$0xf]
      %v213 = vld [vmem:[%s164 + $0x60] sm:$0xf]
      %v214 = vld [vmem:[%s164 + $0x64] sm:$0xf]
      %v215 = vld [vmem:[%s164 + $0x68] sm:$0xf]
      %v216 = vld [vmem:[%s164 + $0x6c] sm:$0xf]
      %v217 = vld [vmem:[%s164 + $0x70] sm:$0xf]
      %v218 = vld [vmem:[%s164 + $0x74] sm:$0xf]
      %v219 = vld [vmem:[%s164 + $0x78] sm:$0xf]
      %v220 = vld [vmem:[%s164 + $0x7c] sm:$0xf]
      %v221 = vld [vmem:[%s164 + $0x80] sm:$0xf]
      %v222 = vld [vmem:[%s164 + $0x84] sm:$0xf]
      %v223 = vld [vmem:[%s164 + $0x88] sm:$0xf]
      %v224 = vld [vmem:[%s164 + $0x8c] sm:$0xf]
      %v225 = vld [vmem:[%s164 + $0x90] sm:$0xf]
      %v226 = vld [vmem:[%s164 + $0x94] sm:$0xf]
      %v227 = vld [vmem:[%s164 + $0x98] sm:$0xf]
      %v228 = vld [vmem:[%s164 + $0x9c] sm:$0xf]
      %v229 = vld [vmem:[%s164 + $0xa0] sm:$0xf]
      %v230 = vld [vmem:[%s164 + $0xa4] sm:$0xf]
      %v231 = vld [vmem:[%s164 + $0xa8] sm:$0xf]
      %v232 = vld [vmem:[%s164 + $0xac] sm:$0xf]
      %v233 = vld [vmem:[%s164 + $0xb0] sm:$0xf]
      %v234 = vld [vmem:[%s164 + $0xb4] sm:$0xf]
      %v235 = vld [vmem:[%s164 + $0xb8] sm:$0xf]
      %v236 = vld [vmem:[%s164 + $0xbc] sm:$0xf]
      %v237 = vld [vmem:[%s164 + $0xc0] sm:$0xf]
      %v238 = vld [vmem:[%s164 + $0xc4] sm:$0xf]
      %v239 = vld [vmem:[%s164 + $0xc8] sm:$0xf]
      %v240 = vld [vmem:[%s164 + $0xcc] sm:$0xf]
      %v241 = vld [vmem:[%s164 + $0xd0] sm:$0xf]
      %v242 = vld [vmem:[%s164 + $0xd4] sm:$0xf]
      %v243 = vld [vmem:[%s164 + $0xd8] sm:$0xf]
      %v244 = vld [vmem:[%s164 + $0xdc] sm:$0xf]
      %v245 = vld [vmem:[%s164 + $0xe0] sm:$0xf]
      %v246 = vld [vmem:[%s164 + $0xe4] sm:$0xf]
      %v247 = vld [vmem:[%s164 + $0xe8] sm:$0xf]
      %v248 = vld [vmem:[%s164 + $0xec] sm:$0xf]
      %v249 = vld [vmem:[%s164 + $0xf0] sm:$0xf]
      %v250 = vld [vmem:[%s164 + $0xf4] sm:$0xf]
      %v251 = vld [vmem:[%s164 + $0xf8] sm:$0xf]
      %v252 = vld [vmem:[%s164 + $0xfc] sm:$0xf]
      %v261 = vunpack.c.l.b16 %v189
      %v262 = vunpack.c.l.b16 %v190
      %v263 = vunpack.c.l.b16 %v191
      %v264 = vunpack.c.l.b16 %v192
      %v265 = vunpack.c.l.b16 %v193
      %v266 = vunpack.c.l.b16 %v194
      %v267 = vunpack.c.l.b16 %v195
      %v268 = vunpack.c.l.b16 %v196
      %v269 = vpack.c.b16 %v262, %v261
      %v270 = vpack.c.b16 %v264, %v263
      %v271 = vpack.c.b16 %v266, %v265
      %v272 = vpack.c.b16 %v268, %v267
      %vm277 = vcmask 523264
      %v279 = vsel %vm277, %v173, 0
      %281 = vmatprep.subr.bf16.mxu0 0
      %282 = vmatpush1.bf16.msra.mxu0 %v269
      %283 = vmatprep.subr.bf16.mxu0 0
      %284 = vmatpush1.bf16.msra.mxu0 %v270
      %285 = vmatprep.subr.bf16.mxu0 0
      %286 = vmatpush1.bf16.msra.mxu0 %v271
      %287 = vmatprep.subr.bf16.mxu0 0
      %288 = vmatpush1.bf16.msra.mxu0 %v272
      %289 = vmatprep.subr.bf16.mxu0 0
      %290 = vmatpush1.bf16.msra.mxu0 0
      %291 = vmatprep.subr.bf16.mxu0 0
      %292 = vmatpush1.bf16.msra.mxu0 0
      %293 = vmatprep.subr.bf16.mxu0 0
      %294 = vmatpush1.bf16.msra.mxu0 0
      %295 = vmatprep.subr.bf16.mxu0 0
      %296 = vmatpush1.bf16.msra.mxu0 0
      %297 = vmatprep.subr.bf16.mxu0 0
      %298 = vmatpush1.bf16.msra.mxu0 0
      %299 = vmatprep.subr.bf16.mxu0 0
      %300 = vmatpush1.bf16.msra.mxu0 0
      %301 = vmatprep.subr.bf16.mxu0 0
      %302 = vmatpush1.bf16.msra.mxu0 0
      %303 = vmatprep.subr.bf16.mxu0 0
      %304 = vmatpush1.bf16.msra.mxu0 0
      %305 = vmatprep.subr.bf16.mxu0 0
      %306 = vmatpush1.bf16.msra.mxu0 0
      %307 = vmatprep.subr.bf16.mxu0 0
      %308 = vmatpush1.bf16.msra.mxu0 0
      %309 = vmatprep.subr.bf16.mxu0 0
      %310 = vmatpush1.bf16.msra.mxu0 0
      %311 = vmatprep.subr.bf16.mxu0 0
      %312 = vmatpush1.bf16.msra.mxu0 0
      %313 = vmatprep.mubr.bf16.mxu0 0
      %314 = vmatmul.mubr.bf16.gmra.mrb[0].mxu0 %v279
      %v315 = vpop.f32.mrb[0].mxu0
      %v316 = vadd.f32 0.0, %v315
      %v317 = vpop.f32.mrb[0].mxu0
      %v318 = vpop.f32.mrb[0].mxu0
      %v319 = vpop.f32.mrb[0].mxu0
      %320 = vdwg.mxu0
      %v329 = vunpack.c.l.b16 %v197
      %v330 = vunpack.c.l.b16 %v198
      %v331 = vunpack.c.l.b16 %v199
      %v332 = vunpack.c.l.b16 %v200
      %v333 = vunpack.c.l.b16 %v201
      %v334 = vunpack.c.l.b16 %v202
      %v335 = vunpack.c.l.b16 %v203
      %v336 = vunpack.c.l.b16 %v204
      %v337 = vpack.c.b16 %v330, %v329
      %v338 = vpack.c.b16 %v332, %v331
      %v339 = vpack.c.b16 %v334, %v333
      %v340 = vpack.c.b16 %v336, %v335
      %v346 = vsel %vm277, %v175, 0
      %348 = vmatprep.subr.bf16.mxu0 0
      %349 = vmatpush1.bf16.msra.mxu0 %v337
      %350 = vmatprep.subr.bf16.mxu0 0
      %351 = vmatpush1.bf16.msra.mxu0 %v338
      %352 = vmatprep.subr.bf16.mxu0 0
      %353 = vmatpush1.bf16.msra.mxu0 %v339
      %354 = vmatprep.subr.bf16.mxu0 0
      %355 = vmatpush1.bf16.msra.mxu0 %v340
      %356 = vmatprep.subr.bf16.mxu0 0
      %357 = vmatpush1.bf16.msra.mxu0 0
      %358 = vmatprep.subr.bf16.mxu0 0
      %359 = vmatpush1.bf16.msra.mxu0 0
      %360 = vmatprep.subr.bf16.mxu0 0
      %361 = vmatpush1.bf16.msra.mxu0 0
      %362 = vmatprep.subr.bf16.mxu0 0
      %363 = vmatpush1.bf16.msra.mxu0 0
      %364 = vmatprep.subr.bf16.mxu0 0
      %365 = vmatpush1.bf16.msra.mxu0 0
      %366 = vmatprep.subr.bf16.mxu0 0
      %367 = vmatpush1.bf16.msra.mxu0 0
      %368 = vmatprep.subr.bf16.mxu0 0
      %369 = vmatpush1.bf16.msra.mxu0 0
      %370 = vmatprep.subr.bf16.mxu0 0
      %371 = vmatpush1.bf16.msra.mxu0 0
      %372 = vmatprep.subr.bf16.mxu0 0
      %373 = vmatpush1.bf16.msra.mxu0 0
      %374 = vmatprep.subr.bf16.mxu0 0
      %375 = vmatpush1.bf16.msra.mxu0 0
      %376 = vmatprep.subr.bf16.mxu0 0
      %377 = vmatpush1.bf16.msra.mxu0 0
      %378 = vmatprep.subr.bf16.mxu0 0
      %379 = vmatpush1.bf16.msra.mxu0 0
      %380 = vmatprep.mubr.bf16.mxu0 0
      %381 = vmatmul.mubr.bf16.gmra.mrb[0].mxu0 %v346
      %v382 = vpop.f32.mrb[0].mxu0
      %v383 = vadd.f32 0.0, %v382
      %v384 = vpop.f32.mrb[0].mxu0
      %v385 = vpop.f32.mrb[0].mxu0
      %v386 = vpop.f32.mrb[0].mxu0
      %387 = vdwg.mxu0
      %v396 = vunpack.c.l.b16 %v205
      %v397 = vunpack.c.l.b16 %v206
      %v398 = vunpack.c.l.b16 %v207
      %v399 = vunpack.c.l.b16 %v208
      %v400 = vunpack.c.l.b16 %v209
      %v401 = vunpack.c.l.b16 %v210
      %v402 = vunpack.c.l.b16 %v211
      %v403 = vunpack.c.l.b16 %v212
      %v404 = vpack.c.b16 %v397, %v396
      %v405 = vpack.c.b16 %v399, %v398
      %v406 = vpack.c.b16 %v401, %v400
      %v407 = vpack.c.b16 %v403, %v402
      %v413 = vsel %vm277, %v177, 0
      %415 = vmatprep.subr.bf16.mxu0 0
      %416 = vmatpush1.bf16.msra.mxu0 %v404
      %417 = vmatprep.subr.bf16.mxu0 0
      %418 = vmatpush1.bf16.msra.mxu0 %v405
      %419 = vmatprep.subr.bf16.mxu0 0
      %420 = vmatpush1.bf16.msra.mxu0 %v406
      %421 = vmatprep.subr.bf16.mxu0 0
      %422 = vmatpush1.bf16.msra.mxu0 %v407
      %423 = vmatprep.subr.bf16.mxu0 0
      %424 = vmatpush1.bf16.msra.mxu0 0
      %425 = vmatprep.subr.bf16.mxu0 0
      %426 = vmatpush1.bf16.msra.mxu0 0
      %427 = vmatprep.subr.bf16.mxu0 0
      %428 = vmatpush1.bf16.msra.mxu0 0
      %429 = vmatprep.subr.bf16.mxu0 0
      %430 = vmatpush1.bf16.msra.mxu0 0
      %431 = vmatprep.subr.bf16.mxu0 0
      %432 = vmatpush1.bf16.msra.mxu0 0
      %433 = vmatprep.subr.bf16.mxu0 0
      %434 = vmatpush1.bf16.msra.mxu0 0
      %435 = vmatprep.subr.bf16.mxu0 0
      %436 = vmatpush1.bf16.msra.mxu0 0
      %437 = vmatprep.subr.bf16.mxu0 0
      %438 = vmatpush1.bf16.msra.mxu0 0
      %439 = vmatprep.subr.bf16.mxu0 0
      %440 = vmatpush1.bf16.msra.mxu0 0
      %441 = vmatprep.subr.bf16.mxu0 0
      %442 = vmatpush1.bf16.msra.mxu0 0
      %443 = vmatprep.subr.bf16.mxu0 0
      %444 = vmatpush1.bf16.msra.mxu0 0
      %445 = vmatprep.subr.bf16.mxu0 0
      %446 = vmatpush1.bf16.msra.mxu0 0
      %447 = vmatprep.mubr.bf16.mxu0 0
      %448 = vmatmul.mubr.bf16.gmra.mrb[0].mxu0 %v413
      %v449 = vpop.f32.mrb[0].mxu0
      %v450 = vadd.f32 0.0, %v449
      %v451 = vpop.f32.mrb[0].mxu0
      %v452 = vpop.f32.mrb[0].mxu0
      %v453 = vpop.f32.mrb[0].mxu0
      %454 = vdwg.mxu0
      %v463 = vunpack.c.l.b16 %v213
      %v464 = vunpack.c.l.b16 %v214
      %v465 = vunpack.c.l.b16 %v215
      %v466 = vunpack.c.l.b16 %v216
      %v467 = vunpack.c.l.b16 %v217
      %v468 = vunpack.c.l.b16 %v218
      %v469 = vunpack.c.l.b16 %v219
      %v470 = vunpack.c.l.b16 %v220
      %v471 = vpack.c.b16 %v464, %v463
      %v472 = vpack.c.b16 %v466, %v465
      %v473 = vpack.c.b16 %v468, %v467
      %v474 = vpack.c.b16 %v470, %v469
      %v480 = vsel %vm277, %v179, 0
      %482 = vmatprep.subr.bf16.mxu0 0
      %483 = vmatpush1.bf16.msra.mxu0 %v471
      %484 = vmatprep.subr.bf16.mxu0 0
      %485 = vmatpush1.bf16.msra.mxu0 %v472
      %486 = vmatprep.subr.bf16.mxu0 0
      %487 = vmatpush1.bf16.msra.mxu0 %v473
      %488 = vmatprep.subr.bf16.mxu0 0
      %489 = vmatpush1.bf16.msra.mxu0 %v474
      %490 = vmatprep.subr.bf16.mxu0 0
      %491 = vmatpush1.bf16.msra.mxu0 0
      %492 = vmatprep.subr.bf16.mxu0 0
      %493 = vmatpush1.bf16.msra.mxu0 0
      %494 = vmatprep.subr.bf16.mxu0 0
      %495 = vmatpush1.bf16.msra.mxu0 0
      %496 = vmatprep.subr.bf16.mxu0 0
      %497 = vmatpush1.bf16.msra.mxu0 0
      %498 = vmatprep.subr.bf16.mxu0 0
      %499 = vmatpush1.bf16.msra.mxu0 0
      %500 = vmatprep.subr.bf16.mxu0 0
      %501 = vmatpush1.bf16.msra.mxu0 0
      %502 = vmatprep.subr.bf16.mxu0 0
      %503 = vmatpush1.bf16.msra.mxu0 0
      %504 = vmatprep.subr.bf16.mxu0 0
      %505 = vmatpush1.bf16.msra.mxu0 0
      %506 = vmatprep.subr.bf16.mxu0 0
      %507 = vmatpush1.bf16.msra.mxu0 0
      %508 = vmatprep.subr.bf16.mxu0 0
      %509 = vmatpush1.bf16.msra.mxu0 0
      %510 = vmatprep.subr.bf16.mxu0 0
      %511 = vmatpush1.bf16.msra.mxu0 0
      %512 = vmatprep.subr.bf16.mxu0 0
      %513 = vmatpush1.bf16.msra.mxu0 0
      %514 = vmatprep.mubr.bf16.mxu0 0
      %515 = vmatmul.mubr.bf16.gmra.mrb[0].mxu0 %v480
      %v516 = vpop.f32.mrb[0].mxu0
      %v517 = vadd.f32 0.0, %v516
      %v518 = vpop.f32.mrb[0].mxu0
      %v519 = vpop.f32.mrb[0].mxu0
      %v520 = vpop.f32.mrb[0].mxu0
      %521 = vdwg.mxu0
      %v530 = vunpack.c.l.b16 %v221
      %v531 = vunpack.c.l.b16 %v222
      %v532 = vunpack.c.l.b16 %v223
      %v533 = vunpack.c.l.b16 %v224
      %v534 = vunpack.c.l.b16 %v225
      %v535 = vunpack.c.l.b16 %v226
      %v536 = vunpack.c.l.b16 %v227
      %v537 = vunpack.c.l.b16 %v228
      %v538 = vpack.c.b16 %v531, %v530
      %v539 = vpack.c.b16 %v533, %v532
      %v540 = vpack.c.b16 %v535, %v534
      %v541 = vpack.c.b16 %v537, %v536
      %v547 = vsel %vm277, %v181, 0
      %549 = vmatprep.subr.bf16.mxu0 0
      %550 = vmatpush1.bf16.msra.mxu0 %v538
      %551 = vmatprep.subr.bf16.mxu0 0
      %552 = vmatpush1.bf16.msra.mxu0 %v539
      %553 = vmatprep.subr.bf16.mxu0 0
      %554 = vmatpush1.bf16.msra.mxu0 %v540
      %555 = vmatprep.subr.bf16.mxu0 0
      %556 = vmatpush1.bf16.msra.mxu0 %v541
      %557 = vmatprep.subr.bf16.mxu0 0
      %558 = vmatpush1.bf16.msra.mxu0 0
      %559 = vmatprep.subr.bf16.mxu0 0
      %560 = vmatpush1.bf16.msra.mxu0 0
      %561 = vmatprep.subr.bf16.mxu0 0
      %562 = vmatpush1.bf16.msra.mxu0 0
      %563 = vmatprep.subr.bf16.mxu0 0
      %564 = vmatpush1.bf16.msra.mxu0 0
      %565 = vmatprep.subr.bf16.mxu0 0
      %566 = vmatpush1.bf16.msra.mxu0 0
      %567 = vmatprep.subr.bf16.mxu0 0
      %568 = vmatpush1.bf16.msra.mxu0 0
      %569 = vmatprep.subr.bf16.mxu0 0
      %570 = vmatpush1.bf16.msra.mxu0 0
      %571 = vmatprep.subr.bf16.mxu0 0
      %572 = vmatpush1.bf16.msra.mxu0 0
      %573 = vmatprep.subr.bf16.mxu0 0
      %574 = vmatpush1.bf16.msra.mxu0 0
      %575 = vmatprep.subr.bf16.mxu0 0
      %576 = vmatpush1.bf16.msra.mxu0 0
      %577 = vmatprep.subr.bf16.mxu0 0
      %578 = vmatpush1.bf16.msra.mxu0 0
      %579 = vmatprep.subr.bf16.mxu0 0
      %580 = vmatpush1.bf16.msra.mxu0 0
      %581 = vmatprep.mubr.bf16.mxu0 0
      %582 = vmatmul.mubr.bf16.gmra.mrb[0].mxu0 %v547
      %v583 = vpop.f32.mrb[0].mxu0
      %v584 = vadd.f32 0.0, %v583
      %v585 = vpop.f32.mrb[0].mxu0
      %v586 = vpop.f32.mrb[0].mxu0
      %v587 = vpop.f32.mrb[0].mxu0
      %588 = vdwg.mxu0
      %v597 = vunpack.c.l.b16 %v229
      %v598 = vunpack.c.l.b16 %v230
      %v599 = vunpack.c.l.b16 %v231
      %v600 = vunpack.c.l.b16 %v232
      %v601 = vunpack.c.l.b16 %v233
      %v602 = vunpack.c.l.b16 %v234
      %v603 = vunpack.c.l.b16 %v235
      %v604 = vunpack.c.l.b16 %v236
      %v605 = vpack.c.b16 %v598, %v597
      %v606 = vpack.c.b16 %v600, %v599
      %v607 = vpack.c.b16 %v602, %v601
      %v608 = vpack.c.b16 %v604, %v603
      %v614 = vsel %vm277, %v183, 0
      %616 = vmatprep.subr.bf16.mxu0 0
      %617 = vmatpush1.bf16.msra.mxu0 %v605
      %618 = vmatprep.subr.bf16.mxu0 0
      %619 = vmatpush1.bf16.msra.mxu0 %v606
      %620 = vmatprep.subr.bf16.mxu0 0
      %621 = vmatpush1.bf16.msra.mxu0 %v607
      %622 = vmatprep.subr.bf16.mxu0 0
      %623 = vmatpush1.bf16.msra.mxu0 %v608
      %624 = vmatprep.subr.bf16.mxu0 0
      %625 = vmatpush1.bf16.msra.mxu0 0
      %626 = vmatprep.subr.bf16.mxu0 0
      %627 = vmatpush1.bf16.msra.mxu0 0
      %628 = vmatprep.subr.bf16.mxu0 0
      %629 = vmatpush1.bf16.msra.mxu0 0
      %630 = vmatprep.subr.bf16.mxu0 0
      %631 = vmatpush1.bf16.msra.mxu0 0
      %632 = vmatprep.subr.bf16.mxu0 0
      %633 = vmatpush1.bf16.msra.mxu0 0
      %634 = vmatprep.subr.bf16.mxu0 0
      %635 = vmatpush1.bf16.msra.mxu0 0
      %636 = vmatprep.subr.bf16.mxu0 0
      %637 = vmatpush1.bf16.msra.mxu0 0
      %638 = vmatprep.subr.bf16.mxu0 0
      %639 = vmatpush1.bf16.msra.mxu0 0
      %640 = vmatprep.subr.bf16.mxu0 0
      %641 = vmatpush1.bf16.msra.mxu0 0
      %642 = vmatprep.subr.bf16.mxu0 0
      %643 = vmatpush1.bf16.msra.mxu0 0
      %644 = vmatprep.subr.bf16.mxu0 0
      %645 = vmatpush1.bf16.msra.mxu0 0
      %646 = vmatprep.subr.bf16.mxu0 0
      %647 = vmatpush1.bf16.msra.mxu0 0
      %648 = vmatprep.mubr.bf16.mxu0 0
      %649 = vmatmul.mubr.bf16.gmra.mrb[0].mxu0 %v614
      %v650 = vpop.f32.mrb[0].mxu0
      %v651 = vadd.f32 0.0, %v650
      %v652 = vpop.f32.mrb[0].mxu0
      %v653 = vpop.f32.mrb[0].mxu0
      %v654 = vpop.f32.mrb[0].mxu0
      %655 = vdwg.mxu0
      %v664 = vunpack.c.l.b16 %v237
      %v665 = vunpack.c.l.b16 %v238
      %v666 = vunpack.c.l.b16 %v239
      %v667 = vunpack.c.l.b16 %v240
      %v668 = vunpack.c.l.b16 %v241
      %v669 = vunpack.c.l.b16 %v242
      %v670 = vunpack.c.l.b16 %v243
      %v671 = vunpack.c.l.b16 %v244
      %v672 = vpack.c.b16 %v665, %v664
      %v673 = vpack.c.b16 %v667, %v666
      %v674 = vpack.c.b16 %v669, %v668
      %v675 = vpack.c.b16 %v671, %v670
      %v681 = vsel %vm277, %v185, 0
      %683 = vmatprep.subr.bf16.mxu0 0
      %684 = vmatpush1.bf16.msra.mxu0 %v672
      %685 = vmatprep.subr.bf16.mxu0 0
      %686 = vmatpush1.bf16.msra.mxu0 %v673
      %687 = vmatprep.subr.bf16.mxu0 0
      %688 = vmatpush1.bf16.msra.mxu0 %v674
      %689 = vmatprep.subr.bf16.mxu0 0
      %690 = vmatpush1.bf16.msra.mxu0 %v675
      %691 = vmatprep.subr.bf16.mxu0 0
      %692 = vmatpush1.bf16.msra.mxu0 0
      %693 = vmatprep.subr.bf16.mxu0 0
      %694 = vmatpush1.bf16.msra.mxu0 0
      %695 = vmatprep.subr.bf16.mxu0 0
      %696 = vmatpush1.bf16.msra.mxu0 0
      %697 = vmatprep.subr.bf16.mxu0 0
      %698 = vmatpush1.bf16.msra.mxu0 0
      %699 = vmatprep.subr.bf16.mxu0 0
      %700 = vmatpush1.bf16.msra.mxu0 0
      %701 = vmatprep.subr.bf16.mxu0 0
      %702 = vmatpush1.bf16.msra.mxu0 0
      %703 = vmatprep.subr.bf16.mxu0 0
      %704 = vmatpush1.bf16.msra.mxu0 0
      %705 = vmatprep.subr.bf16.mxu0 0
      %706 = vmatpush1.bf16.msra.mxu0 0
      %707 = vmatprep.subr.bf16.mxu0 0
      %708 = vmatpush1.bf16.msra.mxu0 0
      %709 = vmatprep.subr.bf16.mxu0 0
      %710 = vmatpush1.bf16.msra.mxu0 0
      %711 = vmatprep.subr.bf16.mxu0 0
      %712 = vmatpush1.bf16.msra.mxu0 0
      %713 = vmatprep.subr.bf16.mxu0 0
      %714 = vmatpush1.bf16.msra.mxu0 0
      %715 = vmatprep.mubr.bf16.mxu0 0
      %716 = vmatmul.mubr.bf16.gmra.mrb[0].mxu0 %v681
      %v717 = vpop.f32.mrb[0].mxu0
      %v718 = vadd.f32 0.0, %v717
      %v719 = vpop.f32.mrb[0].mxu0
      %v720 = vpop.f32.mrb[0].mxu0
      %v721 = vpop.f32.mrb[0].mxu0
      %722 = vdwg.mxu0
      %v731 = vunpack.c.l.b16 %v245
      %v732 = vunpack.c.l.b16 %v246
      %v733 = vunpack.c.l.b16 %v247
      %v734 = vunpack.c.l.b16 %v248
      %v735 = vunpack.c.l.b16 %v249
      %v736 = vunpack.c.l.b16 %v250
      %v737 = vunpack.c.l.b16 %v251
      %v738 = vunpack.c.l.b16 %v252
      %v739 = vpack.c.b16 %v732, %v731
      %v740 = vpack.c.b16 %v734, %v733
      %v741 = vpack.c.b16 %v736, %v735
      %v742 = vpack.c.b16 %v738, %v737
      %v748 = vsel %vm277, %v187, 0
      %750 = vmatprep.subr.bf16.mxu0 0
      %751 = vmatpush1.bf16.msra.mxu0 %v739
      %752 = vmatprep.subr.bf16.mxu0 0
      %753 = vmatpush1.bf16.msra.mxu0 %v740
      %754 = vmatprep.subr.bf16.mxu0 0
      %755 = vmatpush1.bf16.msra.mxu0 %v741
      %756 = vmatprep.subr.bf16.mxu0 0
      %757 = vmatpush1.bf16.msra.mxu0 %v742
      %758 = vmatprep.subr.bf16.mxu0 0
      %759 = vmatpush1.bf16.msra.mxu0 0
      %760 = vmatprep.subr.bf16.mxu0 0
      %761 = vmatpush1.bf16.msra.mxu0 0
      %762 = vmatprep.subr.bf16.mxu0 0
      %763 = vmatpush1.bf16.msra.mxu0 0
      %764 = vmatprep.subr.bf16.mxu0 0
      %765 = vmatpush1.bf16.msra.mxu0 0
      %766 = vmatprep.subr.bf16.mxu0 0
      %767 = vmatpush1.bf16.msra.mxu0 0
      %768 = vmatprep.subr.bf16.mxu0 0
      %769 = vmatpush1.bf16.msra.mxu0 0
      %770 = vmatprep.subr.bf16.mxu0 0
      %771 = vmatpush1.bf16.msra.mxu0 0
      %772 = vmatprep.subr.bf16.mxu0 0
      %773 = vmatpush1.bf16.msra.mxu0 0
      %774 = vmatprep.subr.bf16.mxu0 0
      %775 = vmatpush1.bf16.msra.mxu0 0
      %776 = vmatprep.subr.bf16.mxu0 0
      %777 = vmatpush1.bf16.msra.mxu0 0
      %778 = vmatprep.subr.bf16.mxu0 0
      %779 = vmatpush1.bf16.msra.mxu0 0
      %780 = vmatprep.subr.bf16.mxu0 0
      %781 = vmatpush1.bf16.msra.mxu0 0
      %782 = vmatprep.mubr.bf16.mxu0 0
      %783 = vmatmul.mubr.bf16.gmra.mrb[0].mxu0 %v748
      %v784 = vpop.f32.mrb[0].mxu0
      %v785 = vadd.f32 0.0, %v784
      %v786 = vpop.f32.mrb[0].mxu0
      %v787 = vpop.f32.mrb[0].mxu0
      %v788 = vpop.f32.mrb[0].mxu0
      %789 = vdwg.mxu0
      %v791 = vsel %vm277, %v174, 0
      %793 = vmatprep.subr.bf16.mxu0 0
      %794 = vmatpush1.bf16.msra.mxu0 %v269
      %795 = vmatprep.subr.bf16.mxu0 0
      %796 = vmatpush1.bf16.msra.mxu0 %v270
      %797 = vmatprep.subr.bf16.mxu0 0
      %798 = vmatpush1.bf16.msra.mxu0 %v271
      %799 = vmatprep.subr.bf16.mxu0 0
      %800 = vmatpush1.bf16.msra.mxu0 %v272
      %801 = vmatprep.subr.bf16.mxu0 0
      %802 = vmatpush1.bf16.msra.mxu0 0
      %803 = vmatprep.subr.bf16.mxu0 0
      %804 = vmatpush1.bf16.msra.mxu0 0
      %805 = vmatprep.subr.bf16.mxu0 0
      %806 = vmatpush1.bf16.msra.mxu0 0
      %807 = vmatprep.subr.bf16.mxu0 0
      %808 = vmatpush1.bf16.msra.mxu0 0
      %809 = vmatprep.subr.bf16.mxu0 0
      %810 = vmatpush1.bf16.msra.mxu0 0
      %811 = vmatprep.subr.bf16.mxu0 0
      %812 = vmatpush1.bf16.msra.mxu0 0
      %813 = vmatprep.subr.bf16.mxu0 0
      %814 = vmatpush1.bf16.msra.mxu0 0
      %815 = vmatprep.subr.bf16.mxu0 0
      %816 = vmatpush1.bf16.msra.mxu0 0
      %817 = vmatprep.subr.bf16.mxu0 0
      %818 = vmatpush1.bf16.msra.mxu0 0
      %819 = vmatprep.subr.bf16.mxu0 0
      %820 = vmatpush1.bf16.msra.mxu0 0
      %821 = vmatprep.subr.bf16.mxu0 0
      %822 = vmatpush1.bf16.msra.mxu0 0
      %823 = vmatprep.subr.bf16.mxu0 0
      %824 = vmatpush1.bf16.msra.mxu0 0
      %825 = vmatprep.mubr.bf16.mxu0 0
      %826 = vmatmul.mubr.bf16.gmra.mrb[0].mxu0 %v791
      %v827 = vpop.f32.mrb[0].mxu0
      %v828 = vadd.f32 0.0, %v827
      %v829 = vpop.f32.mrb[0].mxu0
      %v830 = vpop.f32.mrb[0].mxu0
      %v831 = vpop.f32.mrb[0].mxu0
      %832 = vdwg.mxu0
      %v834 = vsel %vm277, %v176, 0
      %836 = vmatprep.subr.bf16.mxu0 0
      %837 = vmatpush1.bf16.msra.mxu0 %v337
      %838 = vmatprep.subr.bf16.mxu0 0
      %839 = vmatpush1.bf16.msra.mxu0 %v338
      %840 = vmatprep.subr.bf16.mxu0 0
      %841 = vmatpush1.bf16.msra.mxu0 %v339
      %842 = vmatprep.subr.bf16.mxu0 0
      %843 = vmatpush1.bf16.msra.mxu0 %v340
      %844 = vmatprep.subr.bf16.mxu0 0
      %845 = vmatpush1.bf16.msra.mxu0 0
      %846 = vmatprep.subr.bf16.mxu0 0
      %847 = vmatpush1.bf16.msra.mxu0 0
      %848 = vmatprep.subr.bf16.mxu0 0
      %849 = vmatpush1.bf16.msra.mxu0 0
      %850 = vmatprep.subr.bf16.mxu0 0
      %851 = vmatpush1.bf16.msra.mxu0 0
      %852 = vmatprep.subr.bf16.mxu0 0
      %853 = vmatpush1.bf16.msra.mxu0 0
      %854 = vmatprep.subr.bf16.mxu0 0
      %855 = vmatpush1.bf16.msra.mxu0 0
      %856 = vmatprep.subr.bf16.mxu0 0
      %857 = vmatpush1.bf16.msra.mxu0 0
      %858 = vmatprep.subr.bf16.mxu0 0
      %859 = vmatpush1.bf16.msra.mxu0 0
      %860 = vmatprep.subr.bf16.mxu0 0
      %861 = vmatpush1.bf16.msra.mxu0 0
      %862 = vmatprep.subr.bf16.mxu0 0
      %863 = vmatpush1.bf16.msra.mxu0 0
      %864 = vmatprep.subr.bf16.mxu0 0
      %865 = vmatpush1.bf16.msra.mxu0 0
      %866 = vmatprep.subr.bf16.mxu0 0
      %867 = vmatpush1.bf16.msra.mxu0 0
      %868 = vmatprep.mubr.bf16.mxu0 0
      %869 = vmatmul.mubr.bf16.gmra.mrb[0].mxu0 %v834
      %v870 = vpop.f32.mrb[0].mxu0
      %v871 = vadd.f32 0.0, %v870
      %v872 = vpop.f32.mrb[0].mxu0
      %v873 = vpop.f32.mrb[0].mxu0
      %v874 = vpop.f32.mrb[0].mxu0
      %875 = vdwg.mxu0
      %v877 = vsel %vm277, %v178, 0
      %879 = vmatprep.subr.bf16.mxu0 0
      %880 = vmatpush1.bf16.msra.mxu0 %v404
      %881 = vmatprep.subr.bf16.mxu0 0
      %882 = vmatpush1.bf16.msra.mxu0 %v405
      %883 = vmatprep.subr.bf16.mxu0 0
      %884 = vmatpush1.bf16.msra.mxu0 %v406
      %885 = vmatprep.subr.bf16.mxu0 0
      %886 = vmatpush1.bf16.msra.mxu0 %v407
      %887 = vmatprep.subr.bf16.mxu0 0
      %888 = vmatpush1.bf16.msra.mxu0 0
      %889 = vmatprep.subr.bf16.mxu0 0
      %890 = vmatpush1.bf16.msra.mxu0 0
      %891 = vmatprep.subr.bf16.mxu0 0
      %892 = vmatpush1.bf16.msra.mxu0 0
      %893 = vmatprep.subr.bf16.mxu0 0
      %894 = vmatpush1.bf16.msra.mxu0 0
      %895 = vmatprep.subr.bf16.mxu0 0
      %896 = vmatpush1.bf16.msra.mxu0 0
      %897 = vmatprep.subr.bf16.mxu0 0
      %898 = vmatpush1.bf16.msra.mxu0 0
      %899 = vmatprep.subr.bf16.mxu0 0
      %900 = vmatpush1.bf16.msra.mxu0 0
      %901 = vmatprep.subr.bf16.mxu0 0
      %902 = vmatpush1.bf16.msra.mxu0 0
      %903 = vmatprep.subr.bf16.mxu0 0
      %904 = vmatpush1.bf16.msra.mxu0 0
      %905 = vmatprep.subr.bf16.mxu0 0
      %906 = vmatpush1.bf16.msra.mxu0 0
      %907 = vmatprep.subr.bf16.mxu0 0
      %908 = vmatpush1.bf16.msra.mxu0 0
      %909 = vmatprep.subr.bf16.mxu0 0
      %910 = vmatpush1.bf16.msra.mxu0 0
      %911 = vmatprep.mubr.bf16.mxu0 0
      %912 = vmatmul.mubr.bf16.gmra.mrb[0].mxu0 %v877
      %v913 = vpop.f32.mrb[0].mxu0
      %v914 = vadd.f32 0.0, %v913
      %v915 = vpop.f32.mrb[0].mxu0
      %v916 = vpop.f32.mrb[0].mxu0
      %v917 = vpop.f32.mrb[0].mxu0
      %918 = vdwg.mxu0
      %v920 = vsel %vm277, %v180, 0
      %922 = vmatprep.subr.bf16.mxu0 0
      %923 = vmatpush1.bf16.msra.mxu0 %v471
      %924 = vmatprep.subr.bf16.mxu0 0
      %925 = vmatpush1.bf16.msra.mxu0 %v472
      %926 = vmatprep.subr.bf16.mxu0 0
      %927 = vmatpush1.bf16.msra.mxu0 %v473
      %928 = vmatprep.subr.bf16.mxu0 0
      %929 = vmatpush1.bf16.msra.mxu0 %v474
      %930 = vmatprep.subr.bf16.mxu0 0
      %931 = vmatpush1.bf16.msra.mxu0 0
      %932 = vmatprep.subr.bf16.mxu0 0
      %933 = vmatpush1.bf16.msra.mxu0 0
      %934 = vmatprep.subr.bf16.mxu0 0
      %935 = vmatpush1.bf16.msra.mxu0 0
      %936 = vmatprep.subr.bf16.mxu0 0
      %937 = vmatpush1.bf16.msra.mxu0 0
      %938 = vmatprep.subr.bf16.mxu0 0
      %939 = vmatpush1.bf16.msra.mxu0 0
      %940 = vmatprep.subr.bf16.mxu0 0
      %941 = vmatpush1.bf16.msra.mxu0 0
      %942 = vmatprep.subr.bf16.mxu0 0
      %943 = vmatpush1.bf16.msra.mxu0 0
      %944 = vmatprep.subr.bf16.mxu0 0
      %945 = vmatpush1.bf16.msra.mxu0 0
      %946 = vmatprep.subr.bf16.mxu0 0
      %947 = vmatpush1.bf16.msra.mxu0 0
      %948 = vmatprep.subr.bf16.mxu0 0
      %949 = vmatpush1.bf16.msra.mxu0 0
      %950 = vmatprep.subr.bf16.mxu0 0
      %951 = vmatpush1.bf16.msra.mxu0 0
      %952 = vmatprep.subr.bf16.mxu0 0
      %953 = vmatpush1.bf16.msra.mxu0 0
      %954 = vmatprep.mubr.bf16.mxu0 0
      %955 = vmatmul.mubr.bf16.gmra.mrb[0].mxu0 %v920
      %v956 = vpop.f32.mrb[0].mxu0
      %v957 = vadd.f32 0.0, %v956
      %v958 = vpop.f32.mrb[0].mxu0
      %v959 = vpop.f32.mrb[0].mxu0
      %v960 = vpop.f32.mrb[0].mxu0
      %961 = vdwg.mxu0
      %v963 = vsel %vm277, %v182, 0
      %965 = vmatprep.subr.bf16.mxu0 0
      %966 = vmatpush1.bf16.msra.mxu0 %v538
      %967 = vmatprep.subr.bf16.mxu0 0
      %968 = vmatpush1.bf16.msra.mxu0 %v539
      %969 = vmatprep.subr.bf16.mxu0 0
      %970 = vmatpush1.bf16.msra.mxu0 %v540
      %971 = vmatprep.subr.bf16.mxu0 0
      %972 = vmatpush1.bf16.msra.mxu0 %v541
      %973 = vmatprep.subr.bf16.mxu0 0
      %974 = vmatpush1.bf16.msra.mxu0 0
      %975 = vmatprep.subr.bf16.mxu0 0
      %976 = vmatpush1.bf16.msra.mxu0 0
      %977 = vmatprep.subr.bf16.mxu0 0
      %978 = vmatpush1.bf16.msra.mxu0 0
      %979 = vmatprep.subr.bf16.mxu0 0
      %980 = vmatpush1.bf16.msra.mxu0 0
      %981 = vmatprep.subr.bf16.mxu0 0
      %982 = vmatpush1.bf16.msra.mxu0 0
      %983 = vmatprep.subr.bf16.mxu0 0
      %984 = vmatpush1.bf16.msra.mxu0 0
      %985 = vmatprep.subr.bf16.mxu0 0
      %986 = vmatpush1.bf16.msra.mxu0 0
      %987 = vmatprep.subr.bf16.mxu0 0
      %988 = vmatpush1.bf16.msra.mxu0 0
      %989 = vmatprep.subr.bf16.mxu0 0
      %990 = vmatpush1.bf16.msra.mxu0 0
      %991 = vmatprep.subr.bf16.mxu0 0
      %992 = vmatpush1.bf16.msra.mxu0 0
      %993 = vmatprep.subr.bf16.mxu0 0
      %994 = vmatpush1.bf16.msra.mxu0 0
      %995 = vmatprep.subr.bf16.mxu0 0
      %996 = vmatpush1.bf16.msra.mxu0 0
      %997 = vmatprep.mubr.bf16.mxu0 0
      %998 = vmatmul.mubr.bf16.gmra.mrb[0].mxu0 %v963
      %v999 = vpop.f32.mrb[0].mxu0
      %v1000 = vadd.f32 0.0, %v999
      %v1001 = vpop.f32.mrb[0].mxu0
      %v1002 = vpop.f32.mrb[0].mxu0
      %v1003 = vpop.f32.mrb[0].mxu0
      %1004 = vdwg.mxu0
      %v1006 = vsel %vm277, %v184, 0
      %1008 = vmatprep.subr.bf16.mxu0 0
      %1009 = vmatpush1.bf16.msra.mxu0 %v605
      %1010 = vmatprep.subr.bf16.mxu0 0
      %1011 = vmatpush1.bf16.msra.mxu0 %v606
      %1012 = vmatprep.subr.bf16.mxu0 0
      %1013 = vmatpush1.bf16.msra.mxu0 %v607
      %1014 = vmatprep.subr.bf16.mxu0 0
      %1015 = vmatpush1.bf16.msra.mxu0 %v608
      %1016 = vmatprep.subr.bf16.mxu0 0
      %1017 = vmatpush1.bf16.msra.mxu0 0
      %1018 = vmatprep.subr.bf16.mxu0 0
      %1019 = vmatpush1.bf16.msra.mxu0 0
      %1020 = vmatprep.subr.bf16.mxu0 0
      %1021 = vmatpush1.bf16.msra.mxu0 0
      %1022 = vmatprep.subr.bf16.mxu0 0
      %1023 = vmatpush1.bf16.msra.mxu0 0
      %1024 = vmatprep.subr.bf16.mxu0 0
      %1025 = vmatpush1.bf16.msra.mxu0 0
      %1026 = vmatprep.subr.bf16.mxu0 0
      %1027 = vmatpush1.bf16.msra.mxu0 0
      %1028 = vmatprep.subr.bf16.mxu0 0
      %1029 = vmatpush1.bf16.msra.mxu0 0
      %1030 = vmatprep.subr.bf16.mxu0 0
      %1031 = vmatpush1.bf16.msra.mxu0 0
      %1032 = vmatprep.subr.bf16.mxu0 0
      %1033 = vmatpush1.bf16.msra.mxu0 0
      %1034 = vmatprep.subr.bf16.mxu0 0
      %1035 = vmatpush1.bf16.msra.mxu0 0
      %1036 = vmatprep.subr.bf16.mxu0 0
      %1037 = vmatpush1.bf16.msra.mxu0 0
      %1038 = vmatprep.subr.bf16.mxu0 0
      %1039 = vmatpush1.bf16.msra.mxu0 0
      %1040 = vmatprep.mubr.bf16.mxu0 0
      %1041 = vmatmul.mubr.bf16.gmra.mrb[0].mxu0 %v1006
      %v1042 = vpop.f32.mrb[0].mxu0
      %v1043 = vadd.f32 0.0, %v1042
      %v1044 = vpop.f32.mrb[0].mxu0
      %v1045 = vpop.f32.mrb[0].mxu0
      %v1046 = vpop.f32.mrb[0].mxu0
      %1047 = vdwg.mxu0
      %v1049 = vsel %vm277, %v186, 0
      %1051 = vmatprep.subr.bf16.mxu0 0
      %1052 = vmatpush1.bf16.msra.mxu0 %v672
      %1053 = vmatprep.subr.bf16.mxu0 0
      %1054 = vmatpush1.bf16.msra.mxu0 %v673
      %1055 = vmatprep.subr.bf16.mxu0 0
      %1056 = vmatpush1.bf16.msra.mxu0 %v674
      %1057 = vmatprep.subr.bf16.mxu0 0
      %1058 = vmatpush1.bf16.msra.mxu0 %v675
      %1059 = vmatprep.subr.bf16.mxu0 0
      %1060 = vmatpush1.bf16.msra.mxu0 0
      %1061 = vmatprep.subr.bf16.mxu0 0
      %1062 = vmatpush1.bf16.msra.mxu0 0
      %1063 = vmatprep.subr.bf16.mxu0 0
      %1064 = vmatpush1.bf16.msra.mxu0 0
      %1065 = vmatprep.subr.bf16.mxu0 0
      %1066 = vmatpush1.bf16.msra.mxu0 0
      %1067 = vmatprep.subr.bf16.mxu0 0
      %1068 = vmatpush1.bf16.msra.mxu0 0
      %1069 = vmatprep.subr.bf16.mxu0 0
      %1070 = vmatpush1.bf16.msra.mxu0 0
      %1071 = vmatprep.subr.bf16.mxu0 0
      %1072 = vmatpush1.bf16.msra.mxu0 0
      %1073 = vmatprep.subr.bf16.mxu0 0
      %1074 = vmatpush1.bf16.msra.mxu0 0
      %1075 = vmatprep.subr.bf16.mxu0 0
      %1076 = vmatpush1.bf16.msra.mxu0 0
      %1077 = vmatprep.subr.bf16.mxu0 0
      %1078 = vmatpush1.bf16.msra.mxu0 0
      %1079 = vmatprep.subr.bf16.mxu0 0
      %1080 = vmatpush1.bf16.msra.mxu0 0
      %1081 = vmatprep.subr.bf16.mxu0 0
      %1082 = vmatpush1.bf16.msra.mxu0 0
      %1083 = vmatprep.mubr.bf16.mxu0 0
      %1084 = vmatmul.mubr.bf16.gmra.mrb[0].mxu0 %v1049
      %v1085 = vpop.f32.mrb[0].mxu0
      %v1086 = vadd.f32 0.0, %v1085
      %v1087 = vpop.f32.mrb[0].mxu0
      %v1088 = vpop.f32.mrb[0].mxu0
      %v1089 = vpop.f32.mrb[0].mxu0
      %1090 = vdwg.mxu0
      %v1092 = vsel %vm277, %v188, 0
      %1094 = vmatprep.subr.bf16.mxu0 0
      %1095 = vmatpush1.bf16.msra.mxu0 %v739
      %1096 = vmatprep.subr.bf16.mxu0 0
      %1097 = vmatpush1.bf16.msra.mxu0 %v740
      %1098 = vmatprep.subr.bf16.mxu0 0
      %1099 = vmatpush1.bf16.msra.mxu0 %v741
      %1100 = vmatprep.subr.bf16.mxu0 0
      %1101 = vmatpush1.bf16.msra.mxu0 %v742
      %1102 = vmatprep.subr.bf16.mxu0 0
      %1103 = vmatpush1.bf16.msra.mxu0 0
      %1104 = vmatprep.subr.bf16.mxu0 0
      %1105 = vmatpush1.bf16.msra.mxu0 0
      %1106 = vmatprep.subr.bf16.mxu0 0
      %1107 = vmatpush1.bf16.msra.mxu0 0
      %1108 = vmatprep.subr.bf16.mxu0 0
      %1109 = vmatpush1.bf16.msra.mxu0 0
      %1110 = vmatprep.subr.bf16.mxu0 0
      %1111 = vmatpush1.bf16.msra.mxu0 0
      %1112 = vmatprep.subr.bf16.mxu0 0
      %1113 = vmatpush1.bf16.msra.mxu0 0
      %1114 = vmatprep.subr.bf16.mxu0 0
      %1115 = vmatpush1.bf16.msra.mxu0 0
      %1116 = vmatprep.subr.bf16.mxu0 0
      %1117 = vmatpush1.bf16.msra.mxu0 0
      %1118 = vmatprep.subr.bf16.mxu0 0
      %1119 = vmatpush1.bf16.msra.mxu0 0
      %1120 = vmatprep.subr.bf16.mxu0 0
      %1121 = vmatpush1.bf16.msra.mxu0 0
      %1122 = vmatprep.subr.bf16.mxu0 0
      %1123 = vmatpush1.bf16.msra.mxu0 0
      %1124 = vmatprep.subr.bf16.mxu0 0
      %1125 = vmatpush1.bf16.msra.mxu0 0
      %1126 = vmatprep.mubr.bf16.mxu0 0
      %1127 = vmatmul.mubr.bf16.gmra.mrb[0].mxu0 %v1092
      %v1128 = vpop.f32.mrb[0].mxu0
      %v1129 = vadd.f32 0.0, %v1128
      %v1130 = vpop.f32.mrb[0].mxu0
      %v1131 = vpop.f32.mrb[0].mxu0
      %v1132 = vpop.f32.mrb[0].mxu0
      %1133 = vdwg.mxu0
      %1142 = vrot.lane.b32.xlu0 %v828, 64
      %v1143 = vpop.permute.xlu0 %1142
      %1144 = vrot.lane.b32.xlu0 %v871, 64
      %v1145 = vpop.permute.xlu0 %1144
      %1146 = vrot.lane.b32.xlu0 %v914, 64
      %v1147 = vpop.permute.xlu0 %1146
      %1148 = vrot.lane.b32.xlu0 %v957, 64
      %v1149 = vpop.permute.xlu0 %1148
      %1150 = vrot.lane.b32.xlu0 %v1000, 64
      %v1151 = vpop.permute.xlu0 %1150
      %1152 = vrot.lane.b32.xlu0 %v1043, 64
      %v1153 = vpop.permute.xlu0 %1152
      %1154 = vrot.lane.b32.xlu0 %v1086, 64
      %v1155 = vpop.permute.xlu0 %1154
      %1156 = vrot.lane.b32.xlu0 %v1129, 64
      %v1157 = vpop.permute.xlu0 %1156
      %v1166 = vsub.f32 %v316, %v1143
      %v1167 = vsub.f32 %v383, %v1145
      %v1168 = vsub.f32 %v450, %v1147
      %v1169 = vsub.f32 %v517, %v1149
      %v1170 = vsub.f32 %v584, %v1151
      %v1171 = vsub.f32 %v651, %v1153
      %v1172 = vsub.f32 %v718, %v1155
      %v1173 = vsub.f32 %v785, %v1157
      %v1174 = vadd.f32 %v316, %v1143
      %v1175 = vadd.f32 %v383, %v1145
      %v1176 = vadd.f32 %v450, %v1147
      %v1177 = vadd.f32 %v517, %v1149
      %v1178 = vadd.f32 %v584, %v1151
      %v1179 = vadd.f32 %v651, %v1153
      %v1180 = vadd.f32 %v718, %v1155
      %v1181 = vadd.f32 %v785, %v1157
      %v1182 = vsel %vm277, %v1166, %v1174
      %v1183 = vsel %vm277, %v1167, %v1175
      %v1184 = vsel %vm277, %v1168, %v1176
      %v1185 = vsel %vm277, %v1169, %v1177
      %v1186 = vsel %vm277, %v1170, %v1178
      %v1187 = vsel %vm277, %v1171, %v1179
      %v1188 = vsel %vm277, %v1172, %v1180
      %v1189 = vsel %vm277, %v1173, %v1181
      %1190 = vst [vmem:[%s170] sm:$0x3] %v1182
      %1191 = vst [vmem:[%s170 + $0x2] sm:$0x3] %v1183
      %1192 = vst [vmem:[%s170 + $0x4] sm:$0x3] %v1184
      %1193 = vst [vmem:[%s170 + $0x6] sm:$0x3] %v1185
      %1194 = vst [vmem:[%s170 + $0x8] sm:$0x3] %v1186
      %1195 = vst [vmem:[%s170 + $0xa] sm:$0x3] %v1187
      %1196 = vst [vmem:[%s170 + $0xc] sm:$0x3] %v1188
      %1197 = vst [vmem:[%s170 + $0xe] sm:$0x3] %v1189
      %s1198 = smul.u32 8, %s13
      %p1199 = scmp.lt.s32.totalorder %s1198, 31
      %s1200 = scalar_select %p1199, %s1198, 31
      %s1201 = smul.addr %s1200, 2
      %s1202 = scalar_lea.vmem %s2, %s1201
      // Predicated region
      $region29: #{spectral_conv2d_packed.1} parent=27 // pred_check
        %p1203 = pneg %p83
      $region30: #{spectral_conv2d_packed.1} parent=27 // pred_check_branch
        %1205 = sbr.rel (%p1203) target = $region32
      $region31: #{spectral_conv2d_packed.1} parent=27 // pred_region
        %s1206 = smul.u32 8, %s13
      $region32: #{spectral_conv2d_packed.1} parent=27 // pred_fallthru
        _
    $region28: #{spectral_conv2d_packed.1} parent=5 // pred_fallthru
      _
    %p1207 = scmp.le.s32.totalorder 2, %s8
    // Predicated region
    $region33: #{spectral_conv2d_packed.1} parent=5 // pred_check
      %p1208 = pneg %p1207
    $region34: #{spectral_conv2d_packed.1} parent=5 // pred_check_branch
      %1210 = sbr.rel (%p1208) target = $region36
    $region35: #{spectral_conv2d_packed.1} parent=5 // pred_region
      %s1211 = ssub.s32 %s8, 2
      // Predicated region
      $region37: #{spectral_conv2d_packed.1} parent=35 // pred_check
        %p1212 = pneg %p89
      $region38: #{spectral_conv2d_packed.1} parent=35 // pred_check_branch
        %1214 = sbr.rel (%p1212) target = $region40
      $region39: #{spectral_conv2d_packed.1} parent=35 // pred_region
        %s1215 = smul.u32 8, %s14
        %p1216 = scmp.lt.s32.totalorder %s1215, 31
        %s1217 = scalar_select %p1216, %s1215, 31
        %s1218 = smul.addr %s1217, 2
        %s1219 = scalar_lea.vmem %s2, %s1218
      $region40: #{spectral_conv2d_packed.1} parent=35 // pred_fallthru
        _
    $region36: #{spectral_conv2d_packed.1} parent=5 // pred_fallthru
      _
  $region6: #{spectral_conv2d_packed.1} parent=0 // loop_footer
    %s12 = sadd.s32 1, %s8
  $region7: #{spectral_conv2d_packed.1} parent=0 // loop_footer_branch
    %7 = sbr.rel target = $region3
  $region8: #{spectral_conv2d_packed.1} parent=0 // loop_exit
    _

</llo_original>
